<compile_context>
chip_gen: v5e
topology: v5e:2x2
jax: 0.10.0
libtpu: 0.0.40
codegen_flags: <defaults>
</compile_context>

<pallas_src>
import jax
import jax.numpy as jnp
from jax.experimental import pallas as pl
from jax.experimental.pallas import tpu as pltpu

# ---- logical sizes (module semantics) ----
D = 32        # per-input feature width (x1, x2, x3 each [B, D])
H = 64        # combined_block hidden width (64 % 8 == 0, used unpadded)
L = 16        # encoder latent width
D_OUT = 32    # decoder output width

LP = 128      # latent padded to one full lane group (zeros propagate exactly)
MAX_BT = 2048  # upper bound on rows per grid step


def full_network_kernel(x1_ref, x2_ref, x3_ref,
                        wc1_ref, wc2_ref, wc3_ref, bc_ref,
                        we_ref, be_ref, wd_ref, bd_ref,
                        out_ref):
    # combined_block: x1@Wc1 + x2@Wc2 + x3@Wc3 (== concat(x1,x2,x3)@Wc), bias, ReLU
    h = jnp.dot(x1_ref[...], wc1_ref[...], preferred_element_type=jnp.float32)
    h += jnp.dot(x2_ref[...], wc2_ref[...], preferred_element_type=jnp.float32)
    h += jnp.dot(x3_ref[...], wc3_ref[...], preferred_element_type=jnp.float32)
    h = jnp.maximum(h + bc_ref[...], 0.0)                     # (BT, H=64)

    # encoder: [BT, 64] @ [64, LP] + bias, ReLU (padded lanes stay exactly 0)
    z = jnp.dot(h.astype(jnp.bfloat16), we_ref[...],
                preferred_element_type=jnp.float32)
    z = jnp.maximum(z + be_ref[...], 0.0)                      # (BT, LP)

    # decoder: [BT, LP] @ [LP, D_OUT] + bias, sigmoid (f32), narrow 32-wide store
    y = jnp.dot(z.astype(jnp.bfloat16), wd_ref[...],
                preferred_element_type=jnp.float32)
    out_ref[...] = jax.nn.sigmoid(y + bd_ref[...])             # (BT, D_OUT)


def _pick_batch_tile(b):
    # Target 512-2048 rows/step, but keep >=2 grid steps when the batch allows
    # (v7x has 2 TensorCores; a single giant tile would leave one idle).
    half = (b + 1) // 2
    bt = ((half + 127) // 128) * 128      # round up to a sublane/MXU-friendly 128
    return max(8, min(MAX_BT, bt))


def full_network(x1, x2, x3, params):
    """x1, x2, x3: [B, D] float32.  Returns [B, D_OUT] float32."""
    wc, bc, we, be, wd, bd = params
    B = x1.shape[0]
    BT = _pick_batch_tile(B)
    grid = (pl.cdiv(B, BT),)

    # Stream activations as bf16 (kernel feeds the MXU in bf16 anyway).
    x1b = x1.astype(jnp.bfloat16)
    x2b = x2.astype(jnp.bfloat16)
    x3b = x3.astype(jnp.bfloat16)

    # Split the combined weight per input branch (concat folded into 3 matmuls).
    wc1 = wc[:D].astype(jnp.bfloat16)          # (D, H)
    wc2 = wc[D:2 * D].astype(jnp.bfloat16)     # (D, H)
    wc3 = wc[2 * D:].astype(jnp.bfloat16)      # (D, H)
    bc_p = bc                                   # (1, H)

    # Encoder: pad only the tiny latent dim to a full lane group.
    we_p = jnp.pad(we, ((0, 0), (0, LP - L))).astype(jnp.bfloat16)   # (H, LP)
    be_p = jnp.pad(be, ((0, 0), (0, LP - L)))                        # (1, LP)

    # Decoder: pad K (latent) rows; output width stays the true D_OUT.
    wd_p = jnp.pad(wd, ((0, LP - L), (0, 0))).astype(jnp.bfloat16)   # (LP, D_OUT)
    bd_p = bd                                                        # (1, D_OUT)

    resident = lambda shape: pl.BlockSpec(shape, lambda i: (0, 0))   # loaded once
    stream = pl.BlockSpec((BT, D), lambda i: (i, 0))                 # activations

    out = pl.pallas_call(
        full_network_kernel,
        out_shape=jax.ShapeDtypeStruct((B, D_OUT), jnp.float32),
        grid=grid,
        in_specs=[
            stream, stream, stream,                       # x1, x2, x3 (bf16)
            resident((D, H)), resident((D, H)), resident((D, H)),  # Wc1..3
            resident((1, H)),                             # bc
            resident((H, LP)), resident((1, LP)),         # encoder W, b
            resident((LP, D_OUT)), resident((1, D_OUT)),  # decoder W, b
        ],
        out_specs=pl.BlockSpec((BT, D_OUT), lambda i: (i, 0)),
        compiler_params=pltpu.CompilerParams(
            dimension_semantics=("parallel",)),           # v7x: shard across 2 TCs
    )(x1b, x2b, x3b, wc1, wc2, wc3, bc_p, we_p, be_p, wd_p, bd_p)

    return out


def init_params(key):
    # Weights stored (in, out) so the kernel does x @ W (== PyTorch x @ W.T).
    k = jax.random.split(key, 6)
    wc = jax.random.normal(k[0], (3 * D, H), jnp.float32) * 0.05
    bc = jax.random.normal(k[1], (1, H), jnp.float32) * 0.05
    we = jax.random.normal(k[2], (H, L), jnp.float32) * 0.05
    be = jax.random.normal(k[3], (1, L), jnp.float32) * 0.05
    wd = jax.random.normal(k[4], (L, D_OUT), jnp.float32) * 0.05
    bd = jax.random.normal(k[5], (1, D_OUT), jnp.float32) * 0.05
    return wc, bc, we, be, wd, bd


def reference_forward(x1, x2, x3, params):
    # pure-JAX f32 reference of the same forward
    wc, bc, we, be, wd, bd = params
    x = jnp.concatenate([x1, x2, x3], axis=-1)
    h = jnp.maximum(x @ wc + bc, 0.0)
    z = jnp.maximum(h @ we + be, 0.0)
    return jax.nn.sigmoid(z @ wd + bd)


if __name__ == "__main__":
    B = 200  # exercises the edge-block path (BT=128 -> grid of 2, last tile partial)
    key = jax.random.PRNGKey(0)
    kx1, kx2, kx3, kp = jax.random.split(key, 4)
    x1 = jax.random.normal(kx1, (B, D), jnp.float32)
    x2 = jax.random.normal(kx2, (B, D), jnp.float32)
    x3 = jax.random.normal(kx3, (B, D), jnp.float32)
    params = init_params(kp)

    out = jax.jit(full_network)(x1, x2, x3, params)
    out = jax.block_until_ready(out)

    ref = reference_forward(x1, x2, x3, params)
    assert out.shape == (B, D_OUT)
    # bf16 activation/weight path vs f32 reference: loose-but-meaningful tolerance.
    assert jnp.allclose(out, ref, atol=2e-2, rtol=2e-2), float(
        jnp.max(jnp.abs(out - ref)))

    # TODO(synk): combined_block/encoder/decoder are injected submodules with
    # unspecified architectures in the original code; a standard concat-MLP
    # autoencoder realization is used here.
    print("KERNEL_OK")
</pallas_src>

<mosaic_0001>
module attributes {stable_mosaic.version = 11 : i64} {
  func.func @full_network_kernel(%arg0: i32, %arg1: memref<128x32xbf16, #tpu.memory_space<vmem>>, %arg2: memref<128x32xbf16, #tpu.memory_space<vmem>>, %arg3: memref<128x32xbf16, #tpu.memory_space<vmem>>, %arg4: memref<32x64xbf16, #tpu.memory_space<vmem>>, %arg5: memref<32x64xbf16, #tpu.memory_space<vmem>>, %arg6: memref<32x64xbf16, #tpu.memory_space<vmem>>, %arg7: memref<1x64xf32, #tpu.memory_space<vmem>>, %arg8: memref<64x128xbf16, #tpu.memory_space<vmem>>, %arg9: memref<1x128xf32, #tpu.memory_space<vmem>>, %arg10: memref<128x32xbf16, #tpu.memory_space<vmem>>, %arg11: memref<1x32xf32, #tpu.memory_space<vmem>>, %arg12: memref<128x32xf32, #tpu.memory_space<vmem>>) attributes {dimension_semantics = [#tpu.dimension_semantics<parallel>], iteration_bounds = array<i64: 2>, scalar_prefetch = 0 : i64, scratch_operands = 0 : i64, tpu.core_type = #tpu.core_type<tc>, window_params = [{transform_indices = @transform_0, window_bounds = array<i64: 128, 32>}, {transform_indices = @transform_1, window_bounds = array<i64: 128, 32>}, {transform_indices = @transform_2, window_bounds = array<i64: 128, 32>}, {pipeline_mode = #tpu.pipeline_mode<synchronous>, transform_indices = @transform_3, window_bounds = array<i64: 32, 64>}, {pipeline_mode = #tpu.pipeline_mode<synchronous>, transform_indices = @transform_4, window_bounds = array<i64: 32, 64>}, {pipeline_mode = #tpu.pipeline_mode<synchronous>, transform_indices = @transform_5, window_bounds = array<i64: 32, 64>}, {pipeline_mode = #tpu.pipeline_mode<synchronous>, transform_indices = @transform_6, window_bounds = array<i64: 1, 64>}, {pipeline_mode = #tpu.pipeline_mode<synchronous>, transform_indices = @transform_7, window_bounds = array<i64: 64, 128>}, {pipeline_mode = #tpu.pipeline_mode<synchronous>, transform_indices = @transform_8, window_bounds = array<i64: 1, 128>}, {pipeline_mode = #tpu.pipeline_mode<synchronous>, transform_indices = @transform_9, window_bounds = array<i64: 128, 32>}, {pipeline_mode = #tpu.pipeline_mode<synchronous>, transform_indices = @transform_10, window_bounds = array<i64: 1, 32>}, {transform_indices = @transform_11, window_bounds = array<i64: 128, 32>}]} {
    %c0 = arith.constant 0 : index
    %c0_0 = arith.constant 0 : index
    %0 = vector.load %arg1[%c0, %c0_0] : memref<128x32xbf16, #tpu.memory_space<vmem>>, vector<128x32xbf16>
    %c0_1 = arith.constant 0 : index
    %c0_2 = arith.constant 0 : index
    %1 = vector.load %arg4[%c0_1, %c0_2] : memref<32x64xbf16, #tpu.memory_space<vmem>>, vector<32x64xbf16>
    %cst = arith.constant dense<0.000000e+00> : vector<128x64xf32>
    %2 = tpu.matmul %0, %1, %cst {dimension_numbers = #tpu.dot_dimension_numbers<[1], [0], [0], [1], [0, 0, 1, 1], [], []>} : vector<128x32xbf16>, vector<32x64xbf16>, vector<128x64xf32> -> vector<128x64xf32>
    %c0_3 = arith.constant 0 : index
    %c0_4 = arith.constant 0 : index
    %3 = vector.load %arg2[%c0_3, %c0_4] : memref<128x32xbf16, #tpu.memory_space<vmem>>, vector<128x32xbf16>
    %c0_5 = arith.constant 0 : index
    %c0_6 = arith.constant 0 : index
    %4 = vector.load %arg5[%c0_5, %c0_6] : memref<32x64xbf16, #tpu.memory_space<vmem>>, vector<32x64xbf16>
    %cst_7 = arith.constant dense<0.000000e+00> : vector<128x64xf32>
    %5 = tpu.matmul %3, %4, %cst_7 {dimension_numbers = #tpu.dot_dimension_numbers<[1], [0], [0], [1], [0, 0, 1, 1], [], []>} : vector<128x32xbf16>, vector<32x64xbf16>, vector<128x64xf32> -> vector<128x64xf32>
    %6 = arith.addf %2, %5 : vector<128x64xf32>
    %c0_8 = arith.constant 0 : index
    %c0_9 = arith.constant 0 : index
    %7 = vector.load %arg3[%c0_8, %c0_9] : memref<128x32xbf16, #tpu.memory_space<vmem>>, vector<128x32xbf16>
    %c0_10 = arith.constant 0 : index
    %c0_11 = arith.constant 0 : index
    %8 = vector.load %arg6[%c0_10, %c0_11] : memref<32x64xbf16, #tpu.memory_space<vmem>>, vector<32x64xbf16>
    %cst_12 = arith.constant dense<0.000000e+00> : vector<128x64xf32>
    %9 = tpu.matmul %7, %8, %cst_12 {dimension_numbers = #tpu.dot_dimension_numbers<[1], [0], [0], [1], [0, 0, 1, 1], [], []>} : vector<128x32xbf16>, vector<32x64xbf16>, vector<128x64xf32> -> vector<128x64xf32>
    %10 = arith.addf %6, %9 : vector<128x64xf32>
    %c0_13 = arith.constant 0 : index
    %c0_14 = arith.constant 0 : index
    %11 = vector.load %arg7[%c0_13, %c0_14] : memref<1x64xf32, #tpu.memory_space<vmem>>, vector<1x64xf32>
    %12 = vector.broadcast %11 : vector<1x64xf32> to vector<128x64xf32>
    %13 = arith.addf %10, %12 : vector<128x64xf32>
    %cst_15 = arith.constant 0.000000e+00 : f32
    %14 = vector.broadcast %cst_15 : f32 to vector<128x64xf32>
    %15 = arith.maximumf %13, %14 : vector<128x64xf32>
    %16 = arith.truncf %15 : vector<128x64xf32> to vector<128x64xbf16>
    %c0_16 = arith.constant 0 : index
    %c0_17 = arith.constant 0 : index
    %17 = vector.load %arg8[%c0_16, %c0_17] : memref<64x128xbf16, #tpu.memory_space<vmem>>, vector<64x128xbf16>
    %cst_18 = arith.constant dense<0.000000e+00> : vector<128x128xf32>
    %18 = tpu.matmul %16, %17, %cst_18 {dimension_numbers = #tpu.dot_dimension_numbers<[1], [0], [0], [1], [0, 0, 1, 1], [], []>} : vector<128x64xbf16>, vector<64x128xbf16>, vector<128x128xf32> -> vector<128x128xf32>
    %c0_19 = arith.constant 0 : index
    %c0_20 = arith.constant 0 : index
    %19 = vector.load %arg9[%c0_19, %c0_20] : memref<1x128xf32, #tpu.memory_space<vmem>>, vector<1x128xf32>
    %20 = vector.broadcast %19 : vector<1x128xf32> to vector<128x128xf32>
    %21 = arith.addf %18, %20 : vector<128x128xf32>
    %cst_21 = arith.constant 0.000000e+00 : f32
    %22 = vector.broadcast %cst_21 : f32 to vector<128x128xf32>
    %23 = arith.maximumf %21, %22 : vector<128x128xf32>
    %24 = arith.truncf %23 : vector<128x128xf32> to vector<128x128xbf16>
    %c0_22 = arith.constant 0 : index
    %c0_23 = arith.constant 0 : index
    %25 = vector.load %arg10[%c0_22, %c0_23] : memref<128x32xbf16, #tpu.memory_space<vmem>>, vector<128x32xbf16>
    %cst_24 = arith.constant dense<0.000000e+00> : vector<128x32xf32>
    %26 = tpu.matmul %24, %25, %cst_24 {dimension_numbers = #tpu.dot_dimension_numbers<[1], [0], [0], [1], [0, 0, 1, 1], [], []>} : vector<128x128xbf16>, vector<128x32xbf16>, vector<128x32xf32> -> vector<128x32xf32>
    %c0_25 = arith.constant 0 : index
    %c0_26 = arith.constant 0 : index
    %27 = vector.load %arg11[%c0_25, %c0_26] : memref<1x32xf32, #tpu.memory_space<vmem>>, vector<1x32xf32>
    %28 = vector.broadcast %27 : vector<1x32xf32> to vector<128x32xf32>
    %29 = arith.addf %26, %28 : vector<128x32xf32>
    %30 = arith.negf %29 : vector<128x32xf32>
    %31 = math.exp %30 : vector<128x32xf32>
    %cst_27 = arith.constant 1.000000e+00 : f32
    %32 = vector.broadcast %cst_27 : f32 to vector<128x32xf32>
    %33 = arith.addf %32, %31 : vector<128x32xf32>
    %34 = arith.divf %32, %33 : vector<128x32xf32>
    %c0_28 = arith.constant 0 : index
    %c0_29 = arith.constant 0 : index
    %35 = vector.load %arg12[%c0_28, %c0_29] : memref<128x32xf32, #tpu.memory_space<vmem>>, vector<128x32xf32>
    tpu.vector_store %arg12[%c0_28, %c0_29], %34 {strides = array<i32>} : memref<128x32xf32, #tpu.memory_space<vmem>>, vector<128x32xf32>,
    return
  }
  func.func @transform_0(%arg0: i32) -> (i32, i32) {
    %c0_i32 = arith.constant 0 : i32
    %c0_i32_0 = arith.constant 0 : i32
    return %arg0, %c0_i32 : i32, i32
  }
  func.func @transform_1(%arg0: i32) -> (i32, i32) {
    %c0_i32 = arith.constant 0 : i32
    %c0_i32_0 = arith.constant 0 : i32
    return %arg0, %c0_i32 : i32, i32
  }
  func.func @transform_2(%arg0: i32) -> (i32, i32) {
    %c0_i32 = arith.constant 0 : i32
    %c0_i32_0 = arith.constant 0 : i32
    return %arg0, %c0_i32 : i32, i32
  }
  func.func @transform_3(%arg0: i32) -> (i32, i32) {
    %c0_i32 = arith.constant 0 : i32
    %c0_i32_0 = arith.constant 0 : i32
    %c0_i32_1 = arith.constant 0 : i32
    return %c0_i32, %c0_i32_0 : i32, i32
  }
  func.func @transform_4(%arg0: i32) -> (i32, i32) {
    %c0_i32 = arith.constant 0 : i32
    %c0_i32_0 = arith.constant 0 : i32
    %c0_i32_1 = arith.constant 0 : i32
    return %c0_i32, %c0_i32_0 : i32, i32
  }
  func.func @transform_5(%arg0: i32) -> (i32, i32) {
    %c0_i32 = arith.constant 0 : i32
    %c0_i32_0 = arith.constant 0 : i32
    %c0_i32_1 = arith.constant 0 : i32
    return %c0_i32, %c0_i32_0 : i32, i32
  }
  func.func @transform_6(%arg0: i32) -> (i32, i32) {
    %c0_i32 = arith.constant 0 : i32
    %c0_i32_0 = arith.constant 0 : i32
    %c0_i32_1 = arith.constant 0 : i32
    return %c0_i32, %c0_i32_0 : i32, i32
  }
  func.func @transform_7(%arg0: i32) -> (i32, i32) {
    %c0_i32 = arith.constant 0 : i32
    %c0_i32_0 = arith.constant 0 : i32
    %c0_i32_1 = arith.constant 0 : i32
    return %c0_i32, %c0_i32_0 : i32, i32
  }
  func.func @transform_8(%arg0: i32) -> (i32, i32) {
    %c0_i32 = arith.constant 0 : i32
    %c0_i32_0 = arith.constant 0 : i32
    %c0_i32_1 = arith.constant 0 : i32
    return %c0_i32, %c0_i32_0 : i32, i32
  }
  func.func @transform_9(%arg0: i32) -> (i32, i32) {
    %c0_i32 = arith.constant 0 : i32
    %c0_i32_0 = arith.constant 0 : i32
    %c0_i32_1 = arith.constant 0 : i32
    return %c0_i32, %c0_i32_0 : i32, i32
  }
  func.func @transform_10(%arg0: i32) -> (i32, i32) {
    %c0_i32 = arith.constant 0 : i32
    %c0_i32_0 = arith.constant 0 : i32
    %c0_i32_1 = arith.constant 0 : i32
    return %c0_i32, %c0_i32_0 : i32, i32
  }
  func.func @transform_11(%arg0: i32) -> (i32, i32) {
    %c0_i32 = arith.constant 0 : i32
    %c0_i32_0 = arith.constant 0 : i32
    return %arg0, %c0_i32 : i32, i32
  }
}

</mosaic_0001>

<llo_original>
// kernel: full_network.1
$region0: #{full_network.1}
  #allocation0 [shape = 'u32[]', space=smem, size = 0x4, offset = 0x4, fixed_abs, tag = 'smem constant byte address 0x4 - core index']
  #allocation1 [shape = 'u32[72,128]{1,0:T(1,128)}', space=vmem, size = 0x9000, scoped, tag = 'internal scratch']
  %s0 = inlined_call_operand.vmem [shape: bf16[200,32], index: 0, kind: input, shape index: {}]
  %s1 = inlined_call_operand.vmem [shape: bf16[200,32], index: 1, kind: input, shape index: {}]
  %s2 = inlined_call_operand.vmem [shape: bf16[200,32], index: 2, kind: input, shape index: {}]
  %s3 = inlined_call_operand.vmem [shape: bf16[32,64], index: 3, kind: input, shape index: {}]
  %s4 = inlined_call_operand.vmem [shape: bf16[32,64], index: 4, kind: input, shape index: {}]
  %s5 = inlined_call_operand.vmem [shape: bf16[32,64], index: 5, kind: input, shape index: {}]
  %s6 = inlined_call_operand.vmem [shape: f32[1,64], index: 6, kind: input, shape index: {}]
  %s7 = inlined_call_operand.vmem [shape: bf16[64,128], index: 7, kind: input, shape index: {}]
  %s8 = inlined_call_operand.vmem [shape: f32[1,128], index: 8, kind: input, shape index: {}]
  %s9 = inlined_call_operand.vmem [shape: bf16[128,32], index: 9, kind: input, shape index: {}]
  %s10 = inlined_call_operand.vmem [shape: f32[1,32], index: 10, kind: input, shape index: {}]
  %s11 = inlined_call_operand.vmem [shape: f32[200,32], index: 11, kind: output, shape index: {}]
  %s12 = sld [smem:[#allocation0]]
  $region125: #{full_network.1} parent=0
    _
  %s14 = ssub.s32 1, %s12
  %s15 = scalar_select 0, %s14, %s12
  $region1: #{full_network.1} parent=0
    #allocation2 [shape = 'u8[131072]{0}', space=vmem, size = 0x20000, scoped, tag = 'output window, operand 0']
    loop: start=0, step=1, limit=4
    $region2: #{full_network.1} parent=1 // loop_pre_header
      _
    $region3: #{full_network.1} parent=1 // loop_header
      %s17 = sphi 0, %s21
      %p18 = scmp.ge.s32.totalorder %s17, 4
      %s27 = sphi 0, %s29
      %s30 = sphi 0, %s27
      %s31 = sphi 0, %s30
      %s47 = sphi 0, %s31
      %s53 = sphi 0, %s55
      %s56 = sphi 0, %s53
      %s57 = sphi 0, %s56
      %s73 = sphi 0, %s57
      %s79 = sphi 0, %s81
      %s82 = sphi 0, %s79
      %s83 = sphi 0, %s82
      %s99 = sphi 0, %s83
      %s103 = sphi 0, %s103
      %s105 = sphi 0, %s103
      %s106 = sphi 0, %s105
      %s120 = sphi 0, %s106
      %s124 = sphi 0, %s124
      %s126 = sphi 0, %s124
      %s127 = sphi 0, %s126
      %s141 = sphi 0, %s127
      %s145 = sphi 0, %s145
      %s147 = sphi 0, %s145
      %s148 = sphi 0, %s147
      %s162 = sphi 0, %s148
      %s166 = sphi 0, %s166
      %s168 = sphi 0, %s166
      %s169 = sphi 0, %s168
      %s183 = sphi 0, %s169
      %s187 = sphi 0, %s187
      %s189 = sphi 0, %s187
      %s190 = sphi 0, %s189
      %s204 = sphi 0, %s190
      %s208 = sphi 0, %s208
      %s210 = sphi 0, %s208
      %s211 = sphi 0, %s210
      %s225 = sphi 0, %s211
      %s229 = sphi 0, %s229
      %s231 = sphi 0, %s229
      %s232 = sphi 0, %s231
      %s246 = sphi 0, %s232
      %s250 = sphi 0, %s250
      %s252 = sphi 0, %s250
      %s253 = sphi 0, %s252
      %s267 = sphi 0, %s253
      %s273 = sphi 0, %s275
      %s276 = sphi 0, %s273
      %s277 = sphi 0, %s276
      %s293 = sphi 0, %s277
    $region4: #{full_network.1} parent=1 // loop_header_branch
      %20 = sbr.rel (%p18) target = $region8
    $region5: #{full_network.1} parent=1 // loop_body
      %s22 = ssub.s32 %s17, 1
      %s23 = ssub.s32 %s17, 2
      %s24 = sadd.s32 %s17, 1
      %s25 = ssub.s32 %s17, %s24
      %p26 = scmp.eq.s32.totalorder %s25, 0
      %s28 = sadd.s32 %s27, 1
      %s29 = scalar_select %p26, %s27, %s28
      %p32 = pneg %p26
      %p33 = scmp.eq.s32.totalorder %s17, 1
      %p34 = por %p32, %p33
      %p35 = scmp.ne.s32.totalorder %s27, %s30
      %p36 = scmp.eq.s32.totalorder %s17, 0
      %p37 = por %p35, %p36
      %p38 = scmp.ne.s32.totalorder %s27, %s30
      %p39 = scmp.eq.s32.totalorder %s22, 1
      %p40 = por %p38, %p39
      %p41 = scmp.ne.s32.totalorder %s30, %s31
      %p42 = scmp.eq.s32.totalorder %s22, 0
      %p43 = por %p41, %p42
      %p44 = scmp.ne.s32.totalorder %s30, %s31
      %p45 = scmp.eq.s32.totalorder %s23, 1
      %p46 = por %p44, %p45
      %p48 = scmp.ne.s32.totalorder %s31, %s47
      %p49 = scmp.eq.s32.totalorder %s23, 0
      %p50 = por %p48, %p49
      %s51 = ssub.s32 %s17, %s24
      %p52 = scmp.eq.s32.totalorder %s51, 0
      %s54 = sadd.s32 %s53, 1
      %s55 = scalar_select %p52, %s53, %s54
      %p58 = pneg %p52
      %p59 = scmp.eq.s32.totalorder %s17, 1
      %p60 = por %p58, %p59
      %p61 = scmp.ne.s32.totalorder %s53, %s56
      %p62 = scmp.eq.s32.totalorder %s17, 0
      %p63 = por %p61, %p62
      %p64 = scmp.ne.s32.totalorder %s53, %s56
      %p65 = scmp.eq.s32.totalorder %s22, 1
      %p66 = por %p64, %p65
      %p67 = scmp.ne.s32.totalorder %s56, %s57
      %p68 = scmp.eq.s32.totalorder %s22, 0
      %p69 = por %p67, %p68
      %p70 = scmp.ne.s32.totalorder %s56, %s57
      %p71 = scmp.eq.s32.totalorder %s23, 1
      %p72 = por %p70, %p71
      %p74 = scmp.ne.s32.totalorder %s57, %s73
      %p75 = scmp.eq.s32.totalorder %s23, 0
      %p76 = por %p74, %p75
      %s77 = ssub.s32 %s17, %s24
      %p78 = scmp.eq.s32.totalorder %s77, 0
      %s80 = sadd.s32 %s79, 1
      %s81 = scalar_select %p78, %s79, %s80
      %p84 = pneg %p78
      %p85 = scmp.eq.s32.totalorder %s17, 1
      %p86 = por %p84, %p85
      %p87 = scmp.ne.s32.totalorder %s79, %s82
      %p88 = scmp.eq.s32.totalorder %s17, 0
      %p89 = por %p87, %p88
      %p90 = scmp.ne.s32.totalorder %s79, %s82
      %p91 = scmp.eq.s32.totalorder %s22, 1
      %p92 = por %p90, %p91
      %p93 = scmp.ne.s32.totalorder %s82, %s83
      %p94 = scmp.eq.s32.totalorder %s22, 0
      %p95 = por %p93, %p94
      %p96 = scmp.ne.s32.totalorder %s82, %s83
      %p97 = scmp.eq.s32.totalorder %s23, 1
      %p98 = por %p96, %p97
      %p100 = scmp.ne.s32.totalorder %s83, %s99
      %p101 = scmp.eq.s32.totalorder %s23, 0
      %p102 = por %p100, %p101
      %s104 = sadd.s32 %s103, 1
      %p107 = scmp.eq.s32.totalorder %s17, 1
      %p108 = scmp.ne.s32.totalorder %s103, %s105
      %p109 = scmp.eq.s32.totalorder %s17, 0
      %p110 = por %p108, %p109
      %p111 = scmp.ne.s32.totalorder %s103, %s105
      %p112 = scmp.eq.s32.totalorder %s22, 1
      %p113 = por %p111, %p112
      %p114 = scmp.ne.s32.totalorder %s105, %s106
      %p115 = scmp.eq.s32.totalorder %s22, 0
      %p116 = por %p114, %p115
      %p117 = scmp.ne.s32.totalorder %s105, %s106
      %p118 = scmp.eq.s32.totalorder %s23, 1
      %p119 = por %p117, %p118
      %p121 = scmp.ne.s32.totalorder %s106, %s120
      %p122 = scmp.eq.s32.totalorder %s23, 0
      %p123 = por %p121, %p122
      %s125 = sadd.s32 %s124, 1
      %p128 = scmp.eq.s32.totalorder %s17, 1
      %p129 = scmp.ne.s32.totalorder %s124, %s126
      %p130 = scmp.eq.s32.totalorder %s17, 0
      %p131 = por %p129, %p130
      %p132 = scmp.ne.s32.totalorder %s124, %s126
      %p133 = scmp.eq.s32.totalorder %s22, 1
      %p134 = por %p132, %p133
      %p135 = scmp.ne.s32.totalorder %s126, %s127
      %p136 = scmp.eq.s32.totalorder %s22, 0
      %p137 = por %p135, %p136
      %p138 = scmp.ne.s32.totalorder %s126, %s127
      %p139 = scmp.eq.s32.totalorder %s23, 1
      %p140 = por %p138, %p139
      %p142 = scmp.ne.s32.totalorder %s127, %s141
      %p143 = scmp.eq.s32.totalorder %s23, 0
      %p144 = por %p142, %p143
      %s146 = sadd.s32 %s145, 1
      %p149 = scmp.eq.s32.totalorder %s17, 1
      %p150 = scmp.ne.s32.totalorder %s145, %s147
      %p151 = scmp.eq.s32.totalorder %s17, 0
      %p152 = por %p150, %p151
      %p153 = scmp.ne.s32.totalorder %s145, %s147
      %p154 = scmp.eq.s32.totalorder %s22, 1
      %p155 = por %p153, %p154
      %p156 = scmp.ne.s32.totalorder %s147, %s148
      %p157 = scmp.eq.s32.totalorder %s22, 0
      %p158 = por %p156, %p157
      %p159 = scmp.ne.s32.totalorder %s147, %s148
      %p160 = scmp.eq.s32.totalorder %s23, 1
      %p161 = por %p159, %p160
      %p163 = scmp.ne.s32.totalorder %s148, %s162
      %p164 = scmp.eq.s32.totalorder %s23, 0
      %p165 = por %p163, %p164
      %s167 = sadd.s32 %s166, 1
      %p170 = scmp.eq.s32.totalorder %s17, 1
      %p171 = scmp.ne.s32.totalorder %s166, %s168
      %p172 = scmp.eq.s32.totalorder %s17, 0
      %p173 = por %p171, %p172
      %p174 = scmp.ne.s32.totalorder %s166, %s168
      %p175 = scmp.eq.s32.totalorder %s22, 1
      %p176 = por %p174, %p175
      %p177 = scmp.ne.s32.totalorder %s168, %s169
      %p178 = scmp.eq.s32.totalorder %s22, 0
      %p179 = por %p177, %p178
      %p180 = scmp.ne.s32.totalorder %s168, %s169
      %p181 = scmp.eq.s32.totalorder %s23, 1
      %p182 = por %p180, %p181
      %p184 = scmp.ne.s32.totalorder %s169, %s183
      %p185 = scmp.eq.s32.totalorder %s23, 0
      %p186 = por %p184, %p185
      %s188 = sadd.s32 %s187, 1
      %p191 = scmp.eq.s32.totalorder %s17, 1
      %p192 = scmp.ne.s32.totalorder %s187, %s189
      %p193 = scmp.eq.s32.totalorder %s17, 0
      %p194 = por %p192, %p193
      %p195 = scmp.ne.s32.totalorder %s187, %s189
      %p196 = scmp.eq.s32.totalorder %s22, 1
      %p197 = por %p195, %p196
      %p198 = scmp.ne.s32.totalorder %s189, %s190
      %p199 = scmp.eq.s32.totalorder %s22, 0
      %p200 = por %p198, %p199
      %p201 = scmp.ne.s32.totalorder %s189, %s190
      %p202 = scmp.eq.s32.totalorder %s23, 1
      %p203 = por %p201, %p202
      %p205 = scmp.ne.s32.totalorder %s190, %s204
      %p206 = scmp.eq.s32.totalorder %s23, 0
      %p207 = por %p205, %p206
      %s209 = sadd.s32 %s208, 1
      %p212 = scmp.eq.s32.totalorder %s17, 1
      %p213 = scmp.ne.s32.totalorder %s208, %s210
      %p214 = scmp.eq.s32.totalorder %s17, 0
      %p215 = por %p213, %p214
      %p216 = scmp.ne.s32.totalorder %s208, %s210
      %p217 = scmp.eq.s32.totalorder %s22, 1
      %p218 = por %p216, %p217
      %p219 = scmp.ne.s32.totalorder %s210, %s211
      %p220 = scmp.eq.s32.totalorder %s22, 0
      %p221 = por %p219, %p220
      %p222 = scmp.ne.s32.totalorder %s210, %s211
      %p223 = scmp.eq.s32.totalorder %s23, 1
      %p224 = por %p222, %p223
      %p226 = scmp.ne.s32.totalorder %s211, %s225
      %p227 = scmp.eq.s32.totalorder %s23, 0
      %p228 = por %p226, %p227
      %s230 = sadd.s32 %s229, 1
      %p233 = scmp.eq.s32.totalorder %s17, 1
      %p234 = scmp.ne.s32.totalorder %s229, %s231
      %p235 = scmp.eq.s32.totalorder %s17, 0
      %p236 = por %p234, %p235
      %p237 = scmp.ne.s32.totalorder %s229, %s231
      %p238 = scmp.eq.s32.totalorder %s22, 1
      %p239 = por %p237, %p238
      %p240 = scmp.ne.s32.totalorder %s231, %s232
      %p241 = scmp.eq.s32.totalorder %s22, 0
      %p242 = por %p240, %p241
      %p243 = scmp.ne.s32.totalorder %s231, %s232
      %p244 = scmp.eq.s32.totalorder %s23, 1
      %p245 = por %p243, %p244
      %p247 = scmp.ne.s32.totalorder %s232, %s246
      %p248 = scmp.eq.s32.totalorder %s23, 0
      %p249 = por %p247, %p248
      %s251 = sadd.s32 %s250, 1
      %p254 = scmp.eq.s32.totalorder %s17, 1
      %p255 = scmp.ne.s32.totalorder %s250, %s252
      %p256 = scmp.eq.s32.totalorder %s17, 0
      %p257 = por %p255, %p256
      %p258 = scmp.ne.s32.totalorder %s250, %s252
      %p259 = scmp.eq.s32.totalorder %s22, 1
      %p260 = por %p258, %p259
      %p261 = scmp.ne.s32.totalorder %s252, %s253
      %p262 = scmp.eq.s32.totalorder %s22, 0
      %p263 = por %p261, %p262
      %p264 = scmp.ne.s32.totalorder %s252, %s253
      %p265 = scmp.eq.s32.totalorder %s23, 1
      %p266 = por %p264, %p265
      %p268 = scmp.ne.s32.totalorder %s253, %s267
      %p269 = scmp.eq.s32.totalorder %s23, 0
      %p270 = por %p268, %p269
      %s271 = ssub.s32 %s17, %s24
      %p272 = scmp.eq.s32.totalorder %s271, 0
      %s274 = sadd.s32 %s273, 1
      %s275 = scalar_select %p272, %s273, %s274
      %p278 = pneg %p272
      %p279 = scmp.eq.s32.totalorder %s17, 1
      %p280 = por %p278, %p279
      %p281 = scmp.ne.s32.totalorder %s273, %s276
      %p282 = scmp.eq.s32.totalorder %s17, 0
      %p283 = por %p281, %p282
      %p284 = scmp.ne.s32.totalorder %s273, %s276
      %p285 = scmp.eq.s32.totalorder %s22, 1
      %p286 = por %p284, %p285
      %p287 = scmp.ne.s32.totalorder %s276, %s277
      %p288 = scmp.eq.s32.totalorder %s22, 0
      %p289 = por %p287, %p288
      %p290 = scmp.ne.s32.totalorder %s276, %s277
      %p291 = scmp.eq.s32.totalorder %s23, 1
      %p292 = por %p290, %p291
      %p294 = scmp.ne.s32.totalorder %s277, %s293
      %p295 = scmp.eq.s32.totalorder %s23, 0
      %p296 = por %p294, %p295
      %p297 = scmp.le.s32.totalorder 1, %s17
      %p298 = scmp.lt.s32.totalorder %s17, 3
      %p299 = pnand %p297, %p298
      %p300 = pneg %p299
      // Predicated region
      $region9: #{full_network.1} parent=5 // pred_check
        _
      $region10: #{full_network.1} parent=5 // pred_check_branch
        %302 = sbr.rel (%p299) target = $region12
      $region11: #{full_network.1} parent=5 // pred_region
        %s303 = ssub.s32 %s17, 1
        // Predicated region
        $region13: #{full_network.1} parent=11 // pred_check
          %p304 = pneg %p116
        $region14: #{full_network.1} parent=11 // pred_check_branch
          %306 = sbr.rel (%p304) target = $region16
        $region15: #{full_network.1} parent=11 // pred_region
          _
        $region16: #{full_network.1} parent=11 // pred_fallthru
          _
        // Predicated region
        $region17: #{full_network.1} parent=11 // pred_check
          %p307 = pneg %p137
        $region18: #{full_network.1} parent=11 // pred_check_branch
          %309 = sbr.rel (%p307) target = $region20
        $region19: #{full_network.1} parent=11 // pred_region
          _
        $region20: #{full_network.1} parent=11 // pred_fallthru
          _
        // Predicated region
        $region21: #{full_network.1} parent=11 // pred_check
          %p310 = pneg %p158
        $region22: #{full_network.1} parent=11 // pred_check_branch
          %312 = sbr.rel (%p310) target = $region24
        $region23: #{full_network.1} parent=11 // pred_region
          _
        $region24: #{full_network.1} parent=11 // pred_fallthru
          _
        // Predicated region
        $region25: #{full_network.1} parent=11 // pred_check
          %p313 = pneg %p179
        $region26: #{full_network.1} parent=11 // pred_check_branch
          %315 = sbr.rel (%p313) target = $region28
        $region27: #{full_network.1} parent=11 // pred_region
          _
        $region28: #{full_network.1} parent=11 // pred_fallthru
          _
        // Predicated region
        $region29: #{full_network.1} parent=11 // pred_check
          %p316 = pneg %p200
        $region30: #{full_network.1} parent=11 // pred_check_branch
          %318 = sbr.rel (%p316) target = $region32
        $region31: #{full_network.1} parent=11 // pred_region
          _
        $region32: #{full_network.1} parent=11 // pred_fallthru
          _
        // Predicated region
        $region33: #{full_network.1} parent=11 // pred_check
          %p319 = pneg %p221
        $region34: #{full_network.1} parent=11 // pred_check_branch
          %321 = sbr.rel (%p319) target = $region36
        $region35: #{full_network.1} parent=11 // pred_region
          _
        $region36: #{full_network.1} parent=11 // pred_fallthru
          _
        // Predicated region
        $region37: #{full_network.1} parent=11 // pred_check
          %p322 = pneg %p242
        $region38: #{full_network.1} parent=11 // pred_check_branch
          %324 = sbr.rel (%p322) target = $region40
        $region39: #{full_network.1} parent=11 // pred_region
          _
        $region40: #{full_network.1} parent=11 // pred_fallthru
          _
        // Predicated region
        $region41: #{full_network.1} parent=11 // pred_check
          %p325 = pneg %p263
        $region42: #{full_network.1} parent=11 // pred_check_branch
          %327 = sbr.rel (%p325) target = $region44
        $region43: #{full_network.1} parent=11 // pred_region
          _
        $region44: #{full_network.1} parent=11 // pred_fallthru
          _
      $region12: #{full_network.1} parent=5 // pred_fallthru
        _
      %p328 = scmp.lt.s32.totalorder %s17, 2
      // Predicated region
      $region45: #{full_network.1} parent=5 // pred_check
        %p329 = pneg %p328
      $region46: #{full_network.1} parent=5 // pred_check_branch
        %331 = sbr.rel (%p329) target = $region48
      $region47: #{full_network.1} parent=5 // pred_region
        // Predicated region
        $region49: #{full_network.1} parent=47 // pred_check
          %p332 = pneg %p37
        $region50: #{full_network.1} parent=47 // pred_check_branch
          %334 = sbr.rel (%p332) target = $region52
        $region51: #{full_network.1} parent=47 // pred_region
          %s335 = smul.u32 16, %s17
          %s336 = ssub.s32 25, %s335
          %p337 = scmp.lt.s32.totalorder %s336, 16
          %s338 = scalar_select %p337, %s336, 16
          %s339 = smul.u32 4, %s338
          %p340 = scmp.lt.s32.totalorder %s335, 24
          %s341 = scalar_select %p340, %s335, 24
          %s342 = smul.addr %s341, 4
          %s343 = scalar_lea.vmem %s0, %s342
          %s344 = smul.u32 16, %s17
          %s345 = ssub.s32 25, %s344
          %p346 = scmp.lt.s32.totalorder %s345, 16
          %s347 = scalar_select %p346, %s345, 16
          %s348 = smul.u32 4, %s347
        $region52: #{full_network.1} parent=47 // pred_fallthru
          _
        // Predicated region
        $region53: #{full_network.1} parent=47 // pred_check
          %p349 = pneg %p63
        $region54: #{full_network.1} parent=47 // pred_check_branch
          %351 = sbr.rel (%p349) target = $region56
        $region55: #{full_network.1} parent=47 // pred_region
          %s352 = smul.u32 16, %s17
          %s353 = ssub.s32 25, %s352
          %p354 = scmp.lt.s32.totalorder %s353, 16
          %s355 = scalar_select %p354, %s353, 16
          %s356 = smul.u32 4, %s355
          %p357 = scmp.lt.s32.totalorder %s352, 24
          %s358 = scalar_select %p357, %s352, 24
          %s359 = smul.addr %s358, 4
          %s360 = scalar_lea.vmem %s1, %s359
          %s361 = smul.u32 16, %s17
          %s362 = ssub.s32 25, %s361
          %p363 = scmp.lt.s32.totalorder %s362, 16
          %s364 = scalar_select %p363, %s362, 16
          %s365 = smul.u32 4, %s364
        $region56: #{full_network.1} parent=47 // pred_fallthru
          _
        // Predicated region
        $region57: #{full_network.1} parent=47 // pred_check
          %p366 = pneg %p89
        $region58: #{full_network.1} parent=47 // pred_check_branch
          %368 = sbr.rel (%p366) target = $region60
        $region59: #{full_network.1} parent=47 // pred_region
          %s369 = smul.u32 16, %s17
          %s370 = ssub.s32 25, %s369
          %p371 = scmp.lt.s32.totalorder %s370, 16
          %s372 = scalar_select %p371, %s370, 16
          %s373 = smul.u32 4, %s372
          %p374 = scmp.lt.s32.totalorder %s369, 24
          %s375 = scalar_select %p374, %s369, 24
          %s376 = smul.addr %s375, 4
          %s377 = scalar_lea.vmem %s2, %s376
          %s378 = smul.u32 16, %s17
          %s379 = ssub.s32 25, %s378
          %p380 = scmp.lt.s32.totalorder %s379, 16
          %s381 = scalar_select %p380, %s379, 16
          %s382 = smul.u32 4, %s381
        $region60: #{full_network.1} parent=47 // pred_fallthru
          _
      $region48: #{full_network.1} parent=5 // pred_fallthru
        _
      %p383 = scmp.le.s32.totalorder 1, %s17
      %p384 = scmp.lt.s32.totalorder %s17, 3
      %p385 = pnand %p383, %p384
      %p386 = pneg %p385
      // Predicated region
      $region61: #{full_network.1} parent=5 // pred_check
        _
      $region62: #{full_network.1} parent=5 // pred_check_branch
        %388 = sbr.rel (%p385) target = $region64
      $region63: #{full_network.1} parent=5 // pred_region
        %s389 = ssub.s32 %s17, 1
        %s390 = smul.u32 16, %s22
        %s391 = ssub.s32 25, %s390
        %p392 = scmp.lt.s32.totalorder %s391, 16
        %s393 = scalar_select %p392, %s391, 16
        %s394 = smul.u32 4, %s393
        %p395 = scmp.lt.s32.totalorder %s390, 24
        %s396 = scalar_select %p395, %s390, 24
        %s397 = smul.addr %s396, 4
        %s398 = scalar_lea.vmem %s0, %s397
        %p399 = pneg %p43
        %p400 = pneg %p40
        %s401 = smul.u32 16, %s22
        %s402 = ssub.s32 25, %s401
        %p403 = scmp.lt.s32.totalorder %s402, 16
        %s404 = scalar_select %p403, %s402, 16
        %s405 = smul.u32 4, %s404
        %p406 = scmp.lt.s32.totalorder %s401, 24
        %s407 = scalar_select %p406, %s401, 24
        %s408 = smul.addr %s407, 4
        %s409 = scalar_lea.vmem %s1, %s408
        %p410 = pneg %p69
        %p411 = pneg %p66
        %s412 = smul.u32 16, %s22
        %s413 = ssub.s32 25, %s412
        %p414 = scmp.lt.s32.totalorder %s413, 16
        %s415 = scalar_select %p414, %s413, 16
        %s416 = smul.u32 4, %s415
        %p417 = scmp.lt.s32.totalorder %s412, 24
        %s418 = scalar_select %p417, %s412, 24
        %s419 = smul.addr %s418, 4
        %s420 = scalar_lea.vmem %s2, %s419
        %p421 = pneg %p95
        %p422 = pneg %p92
        %p423 = pneg %p116
        %p424 = pneg %p113
        %p425 = pneg %p137
        %p426 = pneg %p134
        %p427 = pneg %p158
        %p428 = pneg %p155
        %p429 = pneg %p179
        %p430 = pneg %p176
        %p431 = pneg %p200
        %p432 = pneg %p197
        %p433 = pneg %p221
        %p434 = pneg %p218
        %p435 = pneg %p242
        %p436 = pneg %p239
        %p437 = pneg %p263
        %p438 = pneg %p260
        %p439 = pneg %p289
        %p440 = pneg %p286
        %s441 = sand.u32 %s276, 1
        %s442 = sand.u32 %s276, 1
        %s443 = smul.addr %s442, 128
        %s444 = scalar_lea.vmem [#allocation2], %s443
        %s445 = smul.u32 16, %s22
        %s446 = ssub.s32 25, %s445
        %p447 = scmp.lt.s32.totalorder %s446, 16
        %s448 = scalar_select %p447, %s446, 16
        %s449 = smul.u32 4, %s448
        %p450 = scmp.lt.s32.totalorder %s445, 24
        %s451 = scalar_select %p450, %s445, 24
        %s452 = smul.addr %s451, 4
        %s453 = scalar_lea.vmem %s0, %s452
        %s454 = smul.u32 16, %s22
        %s455 = ssub.s32 25, %s454
        %p456 = scmp.lt.s32.totalorder %s455, 16
        %s457 = scalar_select %p456, %s455, 16
        %s458 = smul.u32 4, %s457
        %s459 = smul.u32 16, %s22
        %s460 = ssub.s32 25, %s459
        %p461 = scmp.lt.s32.totalorder %s460, 16
        %s462 = scalar_select %p461, %s460, 16
        %s463 = smul.u32 4, %s462
        %p464 = scmp.lt.s32.totalorder %s459, 24
        %s465 = scalar_select %p464, %s459, 24
        %s466 = smul.addr %s465, 4
        %s467 = scalar_lea.vmem %s1, %s466
        %s468 = smul.u32 16, %s22
        %s469 = ssub.s32 25, %s468
        %p470 = scmp.lt.s32.totalorder %s469, 16
        %s471 = scalar_select %p470, %s469, 16
        %s472 = smul.u32 4, %s471
        %s473 = smul.u32 16, %s22
        %s474 = ssub.s32 25, %s473
        %p475 = scmp.lt.s32.totalorder %s474, 16
        %s476 = scalar_select %p475, %s474, 16
        %s477 = smul.u32 4, %s476
        %p478 = scmp.lt.s32.totalorder %s473, 24
        %s479 = scalar_select %p478, %s473, 24
        %s480 = smul.addr %s479, 4
        %s481 = scalar_lea.vmem %s2, %s480
        %s482 = smul.u32 16, %s22
        %s483 = ssub.s32 25, %s482
        %p484 = scmp.lt.s32.totalorder %s483, 16
        %s485 = scalar_select %p484, %s483, 16
        %s486 = smul.u32 4, %s485
        %s487 = smul.u32 16, %s22
        %s488 = ssub.s32 25, %s487
        %p489 = scmp.lt.s32.totalorder %s488, 16
        %s490 = scalar_select %p489, %s488, 16
        %s491 = smul.u32 8, %s490
        %v493 = vld [vmem:[%s453] sm:$0xf]
        %v494 = vld [vmem:[%s453 + $0x4] sm:$0xf]
        %v495 = vld [vmem:[%s453 + $0x8] sm:$0xf]
        %v496 = vld [vmem:[%s453 + $0xc] sm:$0xf]
        %v497 = vld [vmem:[%s453 + $0x10] sm:$0xf]
        %v498 = vld [vmem:[%s453 + $0x14] sm:$0xf]
        %v499 = vld [vmem:[%s453 + $0x18] sm:$0xf]
        %v500 = vld [vmem:[%s453 + $0x1c] sm:$0xf]
        %v501 = vld [vmem:[%s453 + $0x20] sm:$0xf]
        %v502 = vld [vmem:[%s453 + $0x24] sm:$0xf]
        %v503 = vld [vmem:[%s453 + $0x28] sm:$0xf]
        %v504 = vld [vmem:[%s453 + $0x2c] sm:$0xf]
        %v505 = vld [vmem:[%s453 + $0x30] sm:$0xf]
        %v506 = vld [vmem:[%s453 + $0x34] sm:$0xf]
        %v507 = vld [vmem:[%s453 + $0x38] sm:$0xf]
        %v508 = vld [vmem:[%s453 + $0x3c] sm:$0xf]
        %v509 = vld [vmem:[%s3] sm:$0xf]
        %v510 = vld [vmem:[%s3 + $0x4] sm:$0xf]
        %v511 = vld [vmem:[%s3 + $0x8] sm:$0xf]
        %v512 = vld [vmem:[%s3 + $0xc] sm:$0xf]
        %v513 = vld [vmem:[%s467] sm:$0xf]
        %v514 = vld [vmem:[%s467 + $0x4] sm:$0xf]
        %v515 = vld [vmem:[%s467 + $0x8] sm:$0xf]
        %v516 = vld [vmem:[%s467 + $0xc] sm:$0xf]
        %v517 = vld [vmem:[%s467 + $0x10] sm:$0xf]
        %v518 = vld [vmem:[%s467 + $0x14] sm:$0xf]
        %v519 = vld [vmem:[%s467 + $0x18] sm:$0xf]
        %v520 = vld [vmem:[%s467 + $0x1c] sm:$0xf]
        %v521 = vld [vmem:[%s467 + $0x20] sm:$0xf]
        %v522 = vld [vmem:[%s467 + $0x24] sm:$0xf]
        %v523 = vld [vmem:[%s467 + $0x28] sm:$0xf]
        %v524 = vld [vmem:[%s467 + $0x2c] sm:$0xf]
        %v525 = vld [vmem:[%s467 + $0x30] sm:$0xf]
        %v526 = vld [vmem:[%s467 + $0x34] sm:$0xf]
        %v527 = vld [vmem:[%s467 + $0x38] sm:$0xf]
        %v528 = vld [vmem:[%s467 + $0x3c] sm:$0xf]
        %v529 = vld [vmem:[%s4] sm:$0xf]
        %v530 = vld [vmem:[%s4 + $0x4] sm:$0xf]
        %v531 = vld [vmem:[%s4 + $0x8] sm:$0xf]
        %v532 = vld [vmem:[%s4 + $0xc] sm:$0xf]
        %v549 = vunpack.c.l.b16 %v513
        %v550 = vunpack.c.l.b16 %v514
        %v551 = vunpack.c.l.b16 %v515
        %v552 = vunpack.c.l.b16 %v516
        %v553 = vunpack.c.l.b16 %v517
        %v554 = vunpack.c.l.b16 %v518
        %v555 = vunpack.c.l.b16 %v519
        %v556 = vunpack.c.l.b16 %v520
        %v557 = vunpack.c.l.b16 %v521
        %v558 = vunpack.c.l.b16 %v522
        %v559 = vunpack.c.l.b16 %v523
        %v560 = vunpack.c.l.b16 %v524
        %v561 = vunpack.c.l.b16 %v525
        %v562 = vunpack.c.l.b16 %v526
        %v563 = vunpack.c.l.b16 %v527
        %v564 = vunpack.c.l.b16 %v528
        %v565 = vpack.c.b16 %v550, %v549
        %v566 = vpack.c.b16 %v552, %v551
        %v567 = vpack.c.b16 %v554, %v553
        %v568 = vpack.c.b16 %v556, %v555
        %v569 = vpack.c.b16 %v558, %v557
        %v570 = vpack.c.b16 %v560, %v559
        %v571 = vpack.c.b16 %v562, %v561
        %v572 = vpack.c.b16 %v564, %v563
        %v577 = vunpack.c.l.b16 %v529
        %v578 = vunpack.c.l.b16 %v530
        %v579 = vunpack.c.l.b16 %v531
        %v580 = vunpack.c.l.b16 %v532
        %v581 = vpack.c.b16 %v578, %v577
        %v582 = vpack.c.b16 %v580, %v579
        %vm585 = vcmask 261120
        %v587 = vsel %vm585, %v565, 0
        %v590 = vsel %vm585, %v566, 0
        %v593 = vsel %vm585, %v567, 0
        %v596 = vsel %vm585, %v568, 0
        %v599 = vsel %vm585, %v569, 0
        %v602 = vsel %vm585, %v570, 0
        %v605 = vsel %vm585, %v571, 0
        %v608 = vsel %vm585, %v572, 0
        %610 = vmatpush.bf16.msra.mxu0 0
        %611 = vmatpush.bf16.msra.mxu0 0
        %612 = vmatpush.bf16.msra.mxu0 0
        %613 = vmatpush.bf16.msra.mxu0 0
        %614 = vmatpush.bf16.msra.mxu0 0
        %615 = vmatpush.bf16.msra.mxu0 0
        %616 = vmatpush.bf16.msra.mxu0 %v582
        %617 = vmatpush.bf16.msra.mxu0 %v581
        %618 = vmatmul.bf16.gmra.mxu0 %v587
        %v619 = vpop.f32.mrf.mxu0
        %v620 = vadd.f32 0.0, %v619
        %v621 = vpop.f32.mrf.mxu0
        %v622 = vadd.f32 0.0, %v621
        %623 = vmatmul.bf16.gmra.mxu0 %v590
        %v624 = vpop.f32.mrf.mxu0
        %v625 = vadd.f32 0.0, %v624
        %v626 = vpop.f32.mrf.mxu0
        %v627 = vadd.f32 0.0, %v626
        %628 = vmatmul.bf16.gmra.mxu0 %v593
        %v629 = vpop.f32.mrf.mxu0
        %v630 = vadd.f32 0.0, %v629
        %v631 = vpop.f32.mrf.mxu0
        %v632 = vadd.f32 0.0, %v631
        %633 = vmatmul.bf16.gmra.mxu0 %v596
        %v634 = vpop.f32.mrf.mxu0
        %v635 = vadd.f32 0.0, %v634
        %v636 = vpop.f32.mrf.mxu0
        %v637 = vadd.f32 0.0, %v636
        %638 = vmatmul.bf16.gmra.mxu0 %v599
        %v639 = vpop.f32.mrf.mxu0
        %v640 = vadd.f32 0.0, %v639
        %v641 = vpop.f32.mrf.mxu0
        %v642 = vadd.f32 0.0, %v641
        %643 = vmatmul.bf16.gmra.mxu0 %v602
        %v644 = vpop.f32.mrf.mxu0
        %v645 = vadd.f32 0.0, %v644
        %v646 = vpop.f32.mrf.mxu0
        %v647 = vadd.f32 0.0, %v646
        %648 = vmatmul.bf16.gmra.mxu0 %v605
        %v649 = vpop.f32.mrf.mxu0
        %v650 = vadd.f32 0.0, %v649
        %v651 = vpop.f32.mrf.mxu0
        %v652 = vadd.f32 0.0, %v651
        %653 = vmatmul.bf16.gmra.mxu0 %v608
        %v654 = vpop.f32.mrf.mxu0
        %v655 = vadd.f32 0.0, %v654
        %v656 = vpop.f32.mrf.mxu0
        %v657 = vadd.f32 0.0, %v656
        %658 = vdwg.mxu0
        %v675 = vunpack.c.l.b16 %v493
        %v676 = vunpack.c.l.b16 %v494
        %v677 = vunpack.c.l.b16 %v495
        %v678 = vunpack.c.l.b16 %v496
        %v679 = vunpack.c.l.b16 %v497
        %v680 = vunpack.c.l.b16 %v498
        %v681 = vunpack.c.l.b16 %v499
        %v682 = vunpack.c.l.b16 %v500
        %v683 = vunpack.c.l.b16 %v501
        %v684 = vunpack.c.l.b16 %v502
        %v685 = vunpack.c.l.b16 %v503
        %v686 = vunpack.c.l.b16 %v504
        %v687 = vunpack.c.l.b16 %v505
        %v688 = vunpack.c.l.b16 %v506
        %v689 = vunpack.c.l.b16 %v507
        %v690 = vunpack.c.l.b16 %v508
        %v691 = vpack.c.b16 %v676, %v675
        %v692 = vpack.c.b16 %v678, %v677
        %v693 = vpack.c.b16 %v680, %v679
        %v694 = vpack.c.b16 %v682, %v681
        %v695 = vpack.c.b16 %v684, %v683
        %v696 = vpack.c.b16 %v686, %v685
        %v697 = vpack.c.b16 %v688, %v687
        %v698 = vpack.c.b16 %v690, %v689
        %v703 = vunpack.c.l.b16 %v509
        %v704 = vunpack.c.l.b16 %v510
        %v705 = vunpack.c.l.b16 %v511
        %v706 = vunpack.c.l.b16 %v512
        %v707 = vpack.c.b16 %v704, %v703
        %v708 = vpack.c.b16 %v706, %v705
        %v712 = vsel %vm585, %v691, 0
        %v715 = vsel %vm585, %v692, 0
        %v718 = vsel %vm585, %v693, 0
        %v721 = vsel %vm585, %v694, 0
        %v724 = vsel %vm585, %v695, 0
        %v727 = vsel %vm585, %v696, 0
        %v730 = vsel %vm585, %v697, 0
        %v733 = vsel %vm585, %v698, 0
        %735 = vmatpush.bf16.msra.mxu0 0
        %736 = vmatpush.bf16.msra.mxu0 0
        %737 = vmatpush.bf16.msra.mxu0 0
        %738 = vmatpush.bf16.msra.mxu0 0
        %739 = vmatpush.bf16.msra.mxu0 0
        %740 = vmatpush.bf16.msra.mxu0 0
        %741 = vmatpush.bf16.msra.mxu0 %v708
        %742 = vmatpush.bf16.msra.mxu0 %v707
        %743 = vmatmul.bf16.gmra.mxu0 %v712
        %v744 = vpop.f32.mrf.mxu0
        %v745 = vadd.f32 %v620, %v744
        %v746 = vpop.f32.mrf.mxu0
        %v747 = vadd.f32 %v622, %v746
        %748 = vmatmul.bf16.gmra.mxu0 %v715
        %v749 = vpop.f32.mrf.mxu0
        %v750 = vadd.f32 %v625, %v749
        %v751 = vpop.f32.mrf.mxu0
        %v752 = vadd.f32 %v627, %v751
        %753 = vmatmul.bf16.gmra.mxu0 %v718
        %v754 = vpop.f32.mrf.mxu0
        %v755 = vadd.f32 %v630, %v754
        %v756 = vpop.f32.mrf.mxu0
        %v757 = vadd.f32 %v632, %v756
        %758 = vmatmul.bf16.gmra.mxu0 %v721
        %v759 = vpop.f32.mrf.mxu0
        %v760 = vadd.f32 %v635, %v759
        %v761 = vpop.f32.mrf.mxu0
        %v762 = vadd.f32 %v637, %v761
        %763 = vmatmul.bf16.gmra.mxu0 %v724
        %v764 = vpop.f32.mrf.mxu0
        %v765 = vadd.f32 %v640, %v764
        %v766 = vpop.f32.mrf.mxu0
        %v767 = vadd.f32 %v642, %v766
        %768 = vmatmul.bf16.gmra.mxu0 %v727
        %v769 = vpop.f32.mrf.mxu0
        %v770 = vadd.f32 %v645, %v769
        %v771 = vpop.f32.mrf.mxu0
        %v772 = vadd.f32 %v647, %v771
        %773 = vmatmul.bf16.gmra.mxu0 %v730
        %v774 = vpop.f32.mrf.mxu0
        %v775 = vadd.f32 %v650, %v774
        %v776 = vpop.f32.mrf.mxu0
        %v777 = vadd.f32 %v652, %v776
        %778 = vmatmul.bf16.gmra.mxu0 %v733
        %v779 = vpop.f32.mrf.mxu0
        %v780 = vadd.f32 %v655, %v779
        %v781 = vpop.f32.mrf.mxu0
        %v782 = vadd.f32 %v657, %v781
        %783 = vdwg.mxu0
        %v784 = vld [vmem:[%s481] sm:$0xf]
        %v785 = vld [vmem:[%s481 + $0x4] sm:$0xf]
        %v786 = vld [vmem:[%s481 + $0x8] sm:$0xf]
        %v787 = vld [vmem:[%s481 + $0xc] sm:$0xf]
        %v788 = vld [vmem:[%s481 + $0x10] sm:$0xf]
        %v789 = vld [vmem:[%s481 + $0x14] sm:$0xf]
        %v790 = vld [vmem:[%s481 + $0x18] sm:$0xf]
        %v791 = vld [vmem:[%s481 + $0x1c] sm:$0xf]
        %v792 = vld [vmem:[%s481 + $0x20] sm:$0xf]
        %v793 = vld [vmem:[%s481 + $0x24] sm:$0xf]
        %v794 = vld [vmem:[%s481 + $0x28] sm:$0xf]
        %v795 = vld [vmem:[%s481 + $0x2c] sm:$0xf]
        %v796 = vld [vmem:[%s481 + $0x30] sm:$0xf]
        %v797 = vld [vmem:[%s481 + $0x34] sm:$0xf]
        %v798 = vld [vmem:[%s481 + $0x38] sm:$0xf]
        %v799 = vld [vmem:[%s481 + $0x3c] sm:$0xf]
        %v800 = vld [vmem:[%s5] sm:$0xf]
        %v801 = vld [vmem:[%s5 + $0x4] sm:$0xf]
        %v802 = vld [vmem:[%s5 + $0x8] sm:$0xf]
        %v803 = vld [vmem:[%s5 + $0xc] sm:$0xf]
        %v820 = vunpack.c.l.b16 %v784
        %v821 = vunpack.c.l.b16 %v785
        %v822 = vunpack.c.l.b16 %v786
        %v823 = vunpack.c.l.b16 %v787
        %v824 = vunpack.c.l.b16 %v788
        %v825 = vunpack.c.l.b16 %v789
        %v826 = vunpack.c.l.b16 %v790
        %v827 = vunpack.c.l.b16 %v791
        %v828 = vunpack.c.l.b16 %v792
        %v829 = vunpack.c.l.b16 %v793
        %v830 = vunpack.c.l.b16 %v794
        %v831 = vunpack.c.l.b16 %v795
        %v832 = vunpack.c.l.b16 %v796
        %v833 = vunpack.c.l.b16 %v797
        %v834 = vunpack.c.l.b16 %v798
        %v835 = vunpack.c.l.b16 %v799
        %v836 = vpack.c.b16 %v821, %v820
        %v837 = vpack.c.b16 %v823, %v822
        %v838 = vpack.c.b16 %v825, %v824
        %v839 = vpack.c.b16 %v827, %v826
        %v840 = vpack.c.b16 %v829, %v828
        %v841 = vpack.c.b16 %v831, %v830
        %v842 = vpack.c.b16 %v833, %v832
        %v843 = vpack.c.b16 %v835, %v834
        %v848 = vunpack.c.l.b16 %v800
        %v849 = vunpack.c.l.b16 %v801
        %v850 = vunpack.c.l.b16 %v802
        %v851 = vunpack.c.l.b16 %v803
        %v852 = vpack.c.b16 %v849, %v848
        %v853 = vpack.c.b16 %v851, %v850
        %v857 = vsel %vm585, %v836, 0
        %v860 = vsel %vm585, %v837, 0
        %v863 = vsel %vm585, %v838, 0
        %v866 = vsel %vm585, %v839, 0
        %v869 = vsel %vm585, %v840, 0
        %v872 = vsel %vm585, %v841, 0
        %v875 = vsel %vm585, %v842, 0
        %v878 = vsel %vm585, %v843, 0
        %880 = vmatpush.bf16.msra.mxu0 0
        %881 = vmatpush.bf16.msra.mxu0 0
        %882 = vmatpush.bf16.msra.mxu0 0
        %883 = vmatpush.bf16.msra.mxu0 0
        %884 = vmatpush.bf16.msra.mxu0 0
        %885 = vmatpush.bf16.msra.mxu0 0
        %886 = vmatpush.bf16.msra.mxu0 %v853
        %887 = vmatpush.bf16.msra.mxu0 %v852
        %888 = vmatmul.bf16.gmra.mxu0 %v857
        %v889 = vpop.f32.mrf.mxu0
        %v890 = vadd.f32 0.0, %v889
        %v891 = vpop.f32.mrf.mxu0
        %v892 = vadd.f32 0.0, %v891
        %893 = vmatmul.bf16.gmra.mxu0 %v860
        %v894 = vpop.f32.mrf.mxu0
        %v895 = vadd.f32 0.0, %v894
        %v896 = vpop.f32.mrf.mxu0
        %v897 = vadd.f32 0.0, %v896
        %898 = vmatmul.bf16.gmra.mxu0 %v863
        %v899 = vpop.f32.mrf.mxu0
        %v900 = vadd.f32 0.0, %v899
        %v901 = vpop.f32.mrf.mxu0
        %v902 = vadd.f32 0.0, %v901
        %903 = vmatmul.bf16.gmra.mxu0 %v866
        %v904 = vpop.f32.mrf.mxu0
        %v905 = vadd.f32 0.0, %v904
        %v906 = vpop.f32.mrf.mxu0
        %v907 = vadd.f32 0.0, %v906
        %908 = vmatmul.bf16.gmra.mxu0 %v869
        %v909 = vpop.f32.mrf.mxu0
        %v910 = vadd.f32 0.0, %v909
        %v911 = vpop.f32.mrf.mxu0
        %v912 = vadd.f32 0.0, %v911
        %913 = vmatmul.bf16.gmra.mxu0 %v872
        %v914 = vpop.f32.mrf.mxu0
        %v915 = vadd.f32 0.0, %v914
        %v916 = vpop.f32.mrf.mxu0
        %v917 = vadd.f32 0.0, %v916
        %918 = vmatmul.bf16.gmra.mxu0 %v875
        %v919 = vpop.f32.mrf.mxu0
        %v920 = vadd.f32 0.0, %v919
        %v921 = vpop.f32.mrf.mxu0
        %v922 = vadd.f32 0.0, %v921
        %923 = vmatmul.bf16.gmra.mxu0 %v878
        %v924 = vpop.f32.mrf.mxu0
        %v925 = vadd.f32 0.0, %v924
        %v926 = vpop.f32.mrf.mxu0
        %v927 = vadd.f32 0.0, %v926
        %928 = vdwg.mxu0
        %v929 = vadd.f32 %v745, %v890
        %v930 = vadd.f32 %v747, %v892
        %v931 = vadd.f32 %v750, %v895
        %v932 = vadd.f32 %v752, %v897
        %v933 = vadd.f32 %v755, %v900
        %v934 = vadd.f32 %v757, %v902
        %v935 = vadd.f32 %v760, %v905
        %v936 = vadd.f32 %v762, %v907
        %v937 = vadd.f32 %v765, %v910
        %v938 = vadd.f32 %v767, %v912
        %v939 = vadd.f32 %v770, %v915
        %v940 = vadd.f32 %v772, %v917
        %v941 = vadd.f32 %v775, %v920
        %v942 = vadd.f32 %v777, %v922
        %v943 = vadd.f32 %v780, %v925
        %v944 = vadd.f32 %v782, %v927
        %v945 = vld [vmem:[%s6] sm:$0x1]
        %v947 = vperm.slane %v945, 0
        %v949 = vadd.f32 %v929, %v947
        %v950 = vadd.f32 %v930, %v947
        %v951 = vadd.f32 %v931, %v947
        %v952 = vadd.f32 %v932, %v947
        %v953 = vadd.f32 %v933, %v947
        %v954 = vadd.f32 %v934, %v947
        %v955 = vadd.f32 %v935, %v947
        %v956 = vadd.f32 %v936, %v947
        %v957 = vadd.f32 %v937, %v947
        %v958 = vadd.f32 %v938, %v947
        %v959 = vadd.f32 %v939, %v947
        %v960 = vadd.f32 %v940, %v947
        %v961 = vadd.f32 %v941, %v947
        %v962 = vadd.f32 %v942, %v947
        %v963 = vadd.f32 %v943, %v947
        %v964 = vadd.f32 %v944, %v947
        %v965 = vmax.f32 %v949, 0.0
        %v966 = vmax.f32 %v950, 0.0
        %v967 = vmax.f32 %v951, 0.0
        %v968 = vmax.f32 %v952, 0.0
        %v969 = vmax.f32 %v953, 0.0
        %v970 = vmax.f32 %v954, 0.0
        %v971 = vmax.f32 %v955, 0.0
        %v972 = vmax.f32 %v956, 0.0
        %v973 = vmax.f32 %v957, 0.0
        %v974 = vmax.f32 %v958, 0.0
        %v975 = vmax.f32 %v959, 0.0
        %v976 = vmax.f32 %v960, 0.0
        %v977 = vmax.f32 %v961, 0.0
        %v978 = vmax.f32 %v962, 0.0
        %v979 = vmax.f32 %v963, 0.0
        %v980 = vmax.f32 %v964, 0.0
        %v981 = vpack.c.bf16 %v966, %v965
        %v982 = vpack.c.bf16 %v968, %v967
        %v983 = vpack.c.bf16 %v970, %v969
        %v984 = vpack.c.bf16 %v972, %v971
        %v985 = vpack.c.bf16 %v974, %v973
        %v986 = vpack.c.bf16 %v976, %v975
        %v987 = vpack.c.bf16 %v978, %v977
        %v988 = vpack.c.bf16 %v980, %v979
        %v989 = vld [vmem:[%s7] sm:$0xf]
        %v990 = vld [vmem:[%s7 + $0x4] sm:$0xf]
        %v991 = vld [vmem:[%s7 + $0x8] sm:$0xf]
        %v992 = vld [vmem:[%s7 + $0xc] sm:$0xf]
        %v993 = vld [vmem:[%s7 + $0x10] sm:$0xf]
        %v994 = vld [vmem:[%s7 + $0x14] sm:$0xf]
        %v995 = vld [vmem:[%s7 + $0x18] sm:$0xf]
        %v996 = vld [vmem:[%s7 + $0x1c] sm:$0xf]
        %v997 = vld [vmem:[%s8] sm:$0x1]
        %v999 = vperm.slane %v997, 0
        %v1009 = vunpack.c.l.b16 %v989
        %v1010 = vunpack.c.l.b16 %v990
        %v1011 = vunpack.c.l.b16 %v991
        %v1012 = vunpack.c.l.b16 %v992
        %v1013 = vunpack.c.l.b16 %v993
        %v1014 = vunpack.c.l.b16 %v994
        %v1015 = vunpack.c.l.b16 %v995
        %v1016 = vunpack.c.l.b16 %v996
        %v1017 = vpack.c.b16 %v1010, %v1009
        %v1018 = vpack.c.b16 %v1012, %v1011
        %v1019 = vpack.c.b16 %v1014, %v1013
        %v1020 = vpack.c.b16 %v1016, %v1015
        %vm1025 = vcmask 523264
        %v1027 = vsel %vm1025, %v981, 0
        %v1030 = vsel %vm1025, %v982, 0
        %v1033 = vsel %vm1025, %v983, 0
        %v1036 = vsel %vm1025, %v984, 0
        %v1039 = vsel %vm1025, %v985, 0
        %v1042 = vsel %vm1025, %v986, 0
        %v1045 = vsel %vm1025, %v987, 0
        %v1048 = vsel %vm1025, %v988, 0
        %1050 = vmatpush.bf16.msra.mxu0 0
        %1051 = vmatpush.bf16.msra.mxu0 0
        %1052 = vmatpush.bf16.msra.mxu0 0
        %1053 = vmatpush.bf16.msra.mxu0 0
        %1054 = vmatpush.bf16.msra.mxu0 %v1020
        %1055 = vmatpush.bf16.msra.mxu0 %v1019
        %1056 = vmatpush.bf16.msra.mxu0 %v1018
        %1057 = vmatpush.bf16.msra.mxu0 %v1017
        %1058 = vmatmul.bf16.gmra.mxu0 %v1027
        %v1059 = vpop.f32.mrf.mxu0
        %v1060 = vadd.f32 %v999, %v1059
        %v1061 = vpop.f32.mrf.mxu0
        %v1062 = vadd.f32 %v999, %v1061
        %1063 = vmatmul.bf16.gmra.mxu0 %v1030
        %v1064 = vpop.f32.mrf.mxu0
        %v1065 = vadd.f32 %v999, %v1064
        %v1066 = vpop.f32.mrf.mxu0
        %v1067 = vadd.f32 %v999, %v1066
        %1068 = vmatmul.bf16.gmra.mxu0 %v1033
        %v1069 = vpop.f32.mrf.mxu0
        %v1070 = vadd.f32 %v999, %v1069
        %v1071 = vpop.f32.mrf.mxu0
        %v1072 = vadd.f32 %v999, %v1071
        %1073 = vmatmul.bf16.gmra.mxu0 %v1036
        %v1074 = vpop.f32.mrf.mxu0
        %v1075 = vadd.f32 %v999, %v1074
        %v1076 = vpop.f32.mrf.mxu0
        %v1077 = vadd.f32 %v999, %v1076
        %1078 = vmatmul.bf16.gmra.mxu0 %v1039
        %v1079 = vpop.f32.mrf.mxu0
        %v1080 = vadd.f32 %v999, %v1079
        %v1081 = vpop.f32.mrf.mxu0
        %v1082 = vadd.f32 %v999, %v1081
        %1083 = vmatmul.bf16.gmra.mxu0 %v1042
        %v1084 = vpop.f32.mrf.mxu0
        %v1085 = vadd.f32 %v999, %v1084
        %v1086 = vpop.f32.mrf.mxu0
        %v1087 = vadd.f32 %v999, %v1086
        %1088 = vmatmul.bf16.gmra.mxu0 %v1045
        %v1089 = vpop.f32.mrf.mxu0
        %v1090 = vadd.f32 %v999, %v1089
        %v1091 = vpop.f32.mrf.mxu0
        %v1092 = vadd.f32 %v999, %v1091
        %1093 = vmatmul.bf16.gmra.mxu0 %v1048
        %v1094 = vpop.f32.mrf.mxu0
        %v1095 = vadd.f32 %v999, %v1094
        %v1096 = vpop.f32.mrf.mxu0
        %v1097 = vadd.f32 %v999, %v1096
        %1098 = vdwg.mxu0
        %v1099 = vmax.f32 %v1060, 0.0
        %v1100 = vmax.f32 %v1062, 0.0
        %v1101 = vmax.f32 %v1065, 0.0
        %v1102 = vmax.f32 %v1067, 0.0
        %v1103 = vmax.f32 %v1070, 0.0
        %v1104 = vmax.f32 %v1072, 0.0
        %v1105 = vmax.f32 %v1075, 0.0
        %v1106 = vmax.f32 %v1077, 0.0
        %v1107 = vmax.f32 %v1080, 0.0
        %v1108 = vmax.f32 %v1082, 0.0
        %v1109 = vmax.f32 %v1085, 0.0
        %v1110 = vmax.f32 %v1087, 0.0
        %v1111 = vmax.f32 %v1090, 0.0
        %v1112 = vmax.f32 %v1092, 0.0
        %v1113 = vmax.f32 %v1095, 0.0
        %v1114 = vmax.f32 %v1097, 0.0
        %v1115 = vpack.c.bf16 %v1100, %v1099
        %v1116 = vpack.c.bf16 %v1102, %v1101
        %v1117 = vpack.c.bf16 %v1104, %v1103
        %v1118 = vpack.c.bf16 %v1106, %v1105
        %v1119 = vpack.c.bf16 %v1108, %v1107
        %v1120 = vpack.c.bf16 %v1110, %v1109
        %v1121 = vpack.c.bf16 %v1112, %v1111
        %v1122 = vpack.c.bf16 %v1114, %v1113
        %v1123 = vld [vmem:[%s9] sm:$0xf]
        %v1124 = vld [vmem:[%s9 + $0x4] sm:$0xf]
        %v1125 = vld [vmem:[%s9 + $0x8] sm:$0xf]
        %v1126 = vld [vmem:[%s9 + $0xc] sm:$0xf]
        %v1127 = vld [vmem:[%s9 + $0x10] sm:$0xf]
        %v1128 = vld [vmem:[%s9 + $0x14] sm:$0xf]
        %v1129 = vld [vmem:[%s9 + $0x18] sm:$0xf]
        %v1130 = vld [vmem:[%s9 + $0x1c] sm:$0xf]
        %v1131 = vld [vmem:[%s9 + $0x20] sm:$0xf]
        %v1132 = vld [vmem:[%s9 + $0x24] sm:$0xf]
        %v1133 = vld [vmem:[%s9 + $0x28] sm:$0xf]
        %v1134 = vld [vmem:[%s9 + $0x2c] sm:$0xf]
        %v1135 = vld [vmem:[%s9 + $0x30] sm:$0xf]
        %v1136 = vld [vmem:[%s9 + $0x34] sm:$0xf]
        %v1137 = vld [vmem:[%s9 + $0x38] sm:$0xf]
        %v1138 = vld [vmem:[%s9 + $0x3c] sm:$0xf]
        %v1139 = vld [vmem:[%s10] sm:$0x1]
        %v1141 = vperm.slane %v1139, 0
        %v1159 = vunpack.c.l.b16 %v1123
        %v1160 = vunpack.c.l.b16 %v1124
        %v1161 = vunpack.c.l.b16 %v1125
        %v1162 = vunpack.c.l.b16 %v1126
        %v1163 = vunpack.c.l.b16 %v1127
        %v1164 = vunpack.c.l.b16 %v1128
        %v1165 = vunpack.c.l.b16 %v1129
        %v1166 = vunpack.c.l.b16 %v1130
        %v1167 = vunpack.c.l.b16 %v1131
        %v1168 = vunpack.c.l.b16 %v1132
        %v1169 = vunpack.c.l.b16 %v1133
        %v1170 = vunpack.c.l.b16 %v1134
        %v1171 = vunpack.c.l.b16 %v1135
        %v1172 = vunpack.c.l.b16 %v1136
        %v1173 = vunpack.c.l.b16 %v1137
        %v1174 = vunpack.c.l.b16 %v1138
        %v1175 = vpack.c.b16 %v1160, %v1159
        %v1176 = vpack.c.b16 %v1162, %v1161
        %v1177 = vpack.c.b16 %v1164, %v1163
        %v1178 = vpack.c.b16 %v1166, %v1165
        %v1179 = vpack.c.b16 %v1168, %v1167
        %v1180 = vpack.c.b16 %v1170, %v1169
        %v1181 = vpack.c.b16 %v1172, %v1171
        %v1182 = vpack.c.b16 %v1174, %v1173
        %1191 = vmatpush.bf16.msra.mxu0 %v1182
        %1192 = vmatpush.bf16.msra.mxu0 %v1181
        %1193 = vmatpush.bf16.msra.mxu0 %v1180
        %1194 = vmatpush.bf16.msra.mxu0 %v1179
        %1195 = vmatpush.bf16.msra.mxu0 %v1178
        %1196 = vmatpush.bf16.msra.mxu0 %v1177
        %1197 = vmatpush.bf16.msra.mxu0 %v1176
        %1198 = vmatpush.bf16.msra.mxu0 %v1175
        %1199 = vmatmul.bf16.gmra.mxu0 %v1115
        %v1200 = vpop.f32.mrf.mxu0
        %v1201 = vadd.f32 %v1141, %v1200
        %v1202 = vpop.f32.mrf.mxu0
        %v1203 = vadd.f32 %v1141, %v1202
        %1204 = vmatmul.bf16.gmra.mxu0 %v1116
        %v1205 = vpop.f32.mrf.mxu0
        %v1206 = vadd.f32 %v1141, %v1205
        %v1207 = vpop.f32.mrf.mxu0
        %v1208 = vadd.f32 %v1141, %v1207
        %1209 = vmatmul.bf16.gmra.mxu0 %v1117
        %v1210 = vpop.f32.mrf.mxu0
        %v1211 = vadd.f32 %v1141, %v1210
        %v1212 = vpop.f32.mrf.mxu0
        %v1213 = vadd.f32 %v1141, %v1212
        %1214 = vmatmul.bf16.gmra.mxu0 %v1118
        %v1215 = vpop.f32.mrf.mxu0
        %v1216 = vadd.f32 %v1141, %v1215
        %v1217 = vpop.f32.mrf.mxu0
        %v1218 = vadd.f32 %v1141, %v1217
        %1219 = vmatmul.bf16.gmra.mxu0 %v1119
        %v1220 = vpop.f32.mrf.mxu0
        %v1221 = vadd.f32 %v1141, %v1220
        %v1222 = vpop.f32.mrf.mxu0
        %v1223 = vadd.f32 %v1141, %v1222
        %1224 = vmatmul.bf16.gmra.mxu0 %v1120
        %v1225 = vpop.f32.mrf.mxu0
        %v1226 = vadd.f32 %v1141, %v1225
        %v1227 = vpop.f32.mrf.mxu0
        %v1228 = vadd.f32 %v1141, %v1227
        %1229 = vmatmul.bf16.gmra.mxu0 %v1121
        %v1230 = vpop.f32.mrf.mxu0
        %v1231 = vadd.f32 %v1141, %v1230
        %v1232 = vpop.f32.mrf.mxu0
        %v1233 = vadd.f32 %v1141, %v1232
        %1234 = vmatmul.bf16.gmra.mxu0 %v1122
        %v1235 = vpop.f32.mrf.mxu0
        %v1236 = vadd.f32 %v1141, %v1235
        %v1237 = vpop.f32.mrf.mxu0
        %v1238 = vadd.f32 %v1141, %v1237
        %1239 = vdwg.mxu0
        %v1240 = vxor.u32 %v1201, 2147483648
        %v1241 = vxor.u32 %v1203, 2147483648
        %v1242 = vxor.u32 %v1206, 2147483648
        %v1243 = vxor.u32 %v1208, 2147483648
        %v1244 = vxor.u32 %v1211, 2147483648
        %v1245 = vxor.u32 %v1213, 2147483648
        %v1246 = vxor.u32 %v1216, 2147483648
        %v1247 = vxor.u32 %v1218, 2147483648
        %v1248 = vxor.u32 %v1221, 2147483648
        %v1249 = vxor.u32 %v1223, 2147483648
        %v1250 = vxor.u32 %v1226, 2147483648
        %v1251 = vxor.u32 %v1228, 2147483648
        %v1252 = vxor.u32 %v1231, 2147483648
        %v1253 = vxor.u32 %v1233, 2147483648
        %v1254 = vxor.u32 %v1236, 2147483648
        %v1255 = vxor.u32 %v1238, 2147483648
        %v1256 = vmul.f32 %v1240, 1.442695
        %v1257 = vpow.pop %v1256
        %v1258 = vmul.f32 %v1241, 1.442695
        %v1259 = vpow.pop %v1258
        %v1260 = vmul.f32 %v1242, 1.442695
        %v1261 = vpow.pop %v1260
        %v1262 = vmul.f32 %v1243, 1.442695
        %v1263 = vpow.pop %v1262
        %v1264 = vmul.f32 %v1244, 1.442695
        %v1265 = vpow.pop %v1264
        %v1266 = vmul.f32 %v1245, 1.442695
        %v1267 = vpow.pop %v1266
        %v1268 = vmul.f32 %v1246, 1.442695
        %v1269 = vpow.pop %v1268
        %v1270 = vmul.f32 %v1247, 1.442695
        %v1271 = vpow.pop %v1270
        %v1272 = vmul.f32 %v1248, 1.442695
        %v1273 = vpow.pop %v1272
        %v1274 = vmul.f32 %v1249, 1.442695
        %v1275 = vpow.pop %v1274
        %v1276 = vmul.f32 %v1250, 1.442695
        %v1277 = vpow.pop %v1276
        %v1278 = vmul.f32 %v1251, 1.442695
        %v1279 = vpow.pop %v1278
        %v1280 = vmul.f32 %v1252, 1.442695
        %v1281 = vpow.pop %v1280
        %v1282 = vmul.f32 %v1253, 1.442695
        %v1283 = vpow.pop %v1282
        %v1284 = vmul.f32 %v1254, 1.442695
        %v1285 = vpow.pop %v1284
        %v1286 = vmul.f32 %v1255, 1.442695
        %v1287 = vpow.pop %v1286
        %v1288 = vadd.f32 %v1257, 1.0
        %v1289 = vadd.f32 %v1259, 1.0
        %v1290 = vadd.f32 %v1261, 1.0
        %v1291 = vadd.f32 %v1263, 1.0
        %v1292 = vadd.f32 %v1265, 1.0
        %v1293 = vadd.f32 %v1267, 1.0
        %v1294 = vadd.f32 %v1269, 1.0
        %v1295 = vadd.f32 %v1271, 1.0
        %v1296 = vadd.f32 %v1273, 1.0
        %v1297 = vadd.f32 %v1275, 1.0
        %v1298 = vadd.f32 %v1277, 1.0
        %v1299 = vadd.f32 %v1279, 1.0
        %v1300 = vadd.f32 %v1281, 1.0
        %v1301 = vadd.f32 %v1283, 1.0
        %v1302 = vadd.f32 %v1285, 1.0
        %v1303 = vadd.f32 %v1287, 1.0
        %v1304 = vrcp.pop %v1288
        %v1305 = vmul.f32 %v1288, %v1304
        %v1306 = vsub.f32 1.0, %v1305
        %v1307 = vmul.f32 %v1304, %v1306
        %v1308 = vadd.f32 %v1304, %v1307
        %vm1309 = vweird.f32 %v1288
        %vm1310 = vweird.f32 %v1304
        %vm1311 = vmor %vm1309, %vm1310
        %v1312 = vsel %vm1311, %v1304, %v1308
        %v1313 = vand.u32 2147483647, %v1288
        %vm1314 = vcmp.eq.f32.partialorder %v1313, 8.507059e+37
        %v1315 = vand.u32 %v1288, 2147483648
        %v1316 = vor.u32 1.1754944e-38, %v1315
        %v1317 = vsel %vm1314, %v1316, %v1312
        %v1318 = vmul.f32 1.0, %v1317
        %v1319 = vrcp.pop %v1289
        %v1320 = vmul.f32 %v1289, %v1319
        %v1321 = vsub.f32 1.0, %v1320
        %v1322 = vmul.f32 %v1319, %v1321
        %v1323 = vadd.f32 %v1319, %v1322
        %vm1324 = vweird.f32 %v1289
        %vm1325 = vweird.f32 %v1319
        %vm1326 = vmor %vm1324, %vm1325
        %v1327 = vsel %vm1326, %v1319, %v1323
        %v1328 = vand.u32 2147483647, %v1289
        %vm1329 = vcmp.eq.f32.partialorder %v1328, 8.507059e+37
        %v1330 = vand.u32 %v1289, 2147483648
        %v1331 = vor.u32 1.1754944e-38, %v1330
        %v1332 = vsel %vm1329, %v1331, %v1327
        %v1333 = vmul.f32 1.0, %v1332
        %v1334 = vrcp.pop %v1290
        %v1335 = vmul.f32 %v1290, %v1334
        %v1336 = vsub.f32 1.0, %v1335
        %v1337 = vmul.f32 %v1334, %v1336
        %v1338 = vadd.f32 %v1334, %v1337
        %vm1339 = vweird.f32 %v1290
        %vm1340 = vweird.f32 %v1334
        %vm1341 = vmor %vm1339, %vm1340
        %v1342 = vsel %vm1341, %v1334, %v1338
        %v1343 = vand.u32 2147483647, %v1290
        %vm1344 = vcmp.eq.f32.partialorder %v1343, 8.507059e+37
        %v1345 = vand.u32 %v1290, 2147483648
        %v1346 = vor.u32 1.1754944e-38, %v1345
        %v1347 = vsel %vm1344, %v1346, %v1342
        %v1348 = vmul.f32 1.0, %v1347
        %v1349 = vrcp.pop %v1291
        %v1350 = vmul.f32 %v1291, %v1349
        %v1351 = vsub.f32 1.0, %v1350
        %v1352 = vmul.f32 %v1349, %v1351
        %v1353 = vadd.f32 %v1349, %v1352
        %vm1354 = vweird.f32 %v1291
        %vm1355 = vweird.f32 %v1349
        %vm1356 = vmor %vm1354, %vm1355
        %v1357 = vsel %vm1356, %v1349, %v1353
        %v1358 = vand.u32 2147483647, %v1291
        %vm1359 = vcmp.eq.f32.partialorder %v1358, 8.507059e+37
        %v1360 = vand.u32 %v1291, 2147483648
        %v1361 = vor.u32 1.1754944e-38, %v1360
        %v1362 = vsel %vm1359, %v1361, %v1357
        %v1363 = vmul.f32 1.0, %v1362
        %v1364 = vrcp.pop %v1292
        %v1365 = vmul.f32 %v1292, %v1364
        %v1366 = vsub.f32 1.0, %v1365
        %v1367 = vmul.f32 %v1364, %v1366
        %v1368 = vadd.f32 %v1364, %v1367
        %vm1369 = vweird.f32 %v1292
        %vm1370 = vweird.f32 %v1364
        %vm1371 = vmor %vm1369, %vm1370
        %v1372 = vsel %vm1371, %v1364, %v1368
        %v1373 = vand.u32 2147483647, %v1292
        %vm1374 = vcmp.eq.f32.partialorder %v1373, 8.507059e+37
        %v1375 = vand.u32 %v1292, 2147483648
        %v1376 = vor.u32 1.1754944e-38, %v1375
        %v1377 = vsel %vm1374, %v1376, %v1372
        %v1378 = vmul.f32 1.0, %v1377
        %v1379 = vrcp.pop %v1293
        %v1380 = vmul.f32 %v1293, %v1379
        %v1381 = vsub.f32 1.0, %v1380
        %v1382 = vmul.f32 %v1379, %v1381
        %v1383 = vadd.f32 %v1379, %v1382
        %vm1384 = vweird.f32 %v1293
        %vm1385 = vweird.f32 %v1379
        %vm1386 = vmor %vm1384, %vm1385
        %v1387 = vsel %vm1386, %v1379, %v1383
        %v1388 = vand.u32 2147483647, %v1293
        %vm1389 = vcmp.eq.f32.partialorder %v1388, 8.507059e+37
        %v1390 = vand.u32 %v1293, 2147483648
        %v1391 = vor.u32 1.1754944e-38, %v1390
        %v1392 = vsel %vm1389, %v1391, %v1387
        %v1393 = vmul.f32 1.0, %v1392
        %v1394 = vrcp.pop %v1294
        %v1395 = vmul.f32 %v1294, %v1394
        %v1396 = vsub.f32 1.0, %v1395
        %v1397 = vmul.f32 %v1394, %v1396
        %v1398 = vadd.f32 %v1394, %v1397
        %vm1399 = vweird.f32 %v1294
        %vm1400 = vweird.f32 %v1394
        %vm1401 = vmor %vm1399, %vm1400
        %v1402 = vsel %vm1401, %v1394, %v1398
        %v1403 = vand.u32 2147483647, %v1294
        %vm1404 = vcmp.eq.f32.partialorder %v1403, 8.507059e+37
        %v1405 = vand.u32 %v1294, 2147483648
        %v1406 = vor.u32 1.1754944e-38, %v1405
        %v1407 = vsel %vm1404, %v1406, %v1402
        %v1408 = vmul.f32 1.0, %v1407
        %v1409 = vrcp.pop %v1295
        %v1410 = vmul.f32 %v1295, %v1409
        %v1411 = vsub.f32 1.0, %v1410
        %v1412 = vmul.f32 %v1409, %v1411
        %v1413 = vadd.f32 %v1409, %v1412
        %vm1414 = vweird.f32 %v1295
        %vm1415 = vweird.f32 %v1409
        %vm1416 = vmor %vm1414, %vm1415
        %v1417 = vsel %vm1416, %v1409, %v1413
        %v1418 = vand.u32 2147483647, %v1295
        %vm1419 = vcmp.eq.f32.partialorder %v1418, 8.507059e+37
        %v1420 = vand.u32 %v1295, 2147483648
        %v1421 = vor.u32 1.1754944e-38, %v1420
        %v1422 = vsel %vm1419, %v1421, %v1417
        %v1423 = vmul.f32 1.0, %v1422
        %v1424 = vrcp.pop %v1296
        %v1425 = vmul.f32 %v1296, %v1424
        %v1426 = vsub.f32 1.0, %v1425
        %v1427 = vmul.f32 %v1424, %v1426
        %v1428 = vadd.f32 %v1424, %v1427
        %vm1429 = vweird.f32 %v1296
        %vm1430 = vweird.f32 %v1424
        %vm1431 = vmor %vm1429, %vm1430
        %v1432 = vsel %vm1431, %v1424, %v1428
        %v1433 = vand.u32 2147483647, %v1296
        %vm1434 = vcmp.eq.f32.partialorder %v1433, 8.507059e+37
        %v1435 = vand.u32 %v1296, 2147483648
        %v1436 = vor.u32 1.1754944e-38, %v1435
        %v1437 = vsel %vm1434, %v1436, %v1432
        %v1438 = vmul.f32 1.0, %v1437
        %v1439 = vrcp.pop %v1297
        %v1440 = vmul.f32 %v1297, %v1439
        %v1441 = vsub.f32 1.0, %v1440
        %v1442 = vmul.f32 %v1439, %v1441
        %v1443 = vadd.f32 %v1439, %v1442
        %vm1444 = vweird.f32 %v1297
        %vm1445 = vweird.f32 %v1439
        %vm1446 = vmor %vm1444, %vm1445
        %v1447 = vsel %vm1446, %v1439, %v1443
        %v1448 = vand.u32 2147483647, %v1297
        %vm1449 = vcmp.eq.f32.partialorder %v1448, 8.507059e+37
        %v1450 = vand.u32 %v1297, 2147483648
        %v1451 = vor.u32 1.1754944e-38, %v1450
        %v1452 = vsel %vm1449, %v1451, %v1447
        %v1453 = vmul.f32 1.0, %v1452
        %v1454 = vrcp.pop %v1298
        %v1455 = vmul.f32 %v1298, %v1454
        %v1456 = vsub.f32 1.0, %v1455
        %v1457 = vmul.f32 %v1454, %v1456
        %v1458 = vadd.f32 %v1454, %v1457
        %vm1459 = vweird.f32 %v1298
        %vm1460 = vweird.f32 %v1454
        %vm1461 = vmor %vm1459, %vm1460
        %v1462 = vsel %vm1461, %v1454, %v1458
        %v1463 = vand.u32 2147483647, %v1298
        %vm1464 = vcmp.eq.f32.partialorder %v1463, 8.507059e+37
        %v1465 = vand.u32 %v1298, 2147483648
        %v1466 = vor.u32 1.1754944e-38, %v1465
        %v1467 = vsel %vm1464, %v1466, %v1462
        %v1468 = vmul.f32 1.0, %v1467
        %v1469 = vrcp.pop %v1299
        %v1470 = vmul.f32 %v1299, %v1469
        %v1471 = vsub.f32 1.0, %v1470
        %v1472 = vmul.f32 %v1469, %v1471
        %v1473 = vadd.f32 %v1469, %v1472
        %vm1474 = vweird.f32 %v1299
        %vm1475 = vweird.f32 %v1469
        %vm1476 = vmor %vm1474, %vm1475
        %v1477 = vsel %vm1476, %v1469, %v1473
        %v1478 = vand.u32 2147483647, %v1299
        %vm1479 = vcmp.eq.f32.partialorder %v1478, 8.507059e+37
        %v1480 = vand.u32 %v1299, 2147483648
        %v1481 = vor.u32 1.1754944e-38, %v1480
        %v1482 = vsel %vm1479, %v1481, %v1477
        %v1483 = vmul.f32 1.0, %v1482
        %v1484 = vrcp.pop %v1300
        %v1485 = vmul.f32 %v1300, %v1484
        %v1486 = vsub.f32 1.0, %v1485
        %v1487 = vmul.f32 %v1484, %v1486
        %v1488 = vadd.f32 %v1484, %v1487
        %vm1489 = vweird.f32 %v1300
        %vm1490 = vweird.f32 %v1484
        %vm1491 = vmor %vm1489, %vm1490
        %v1492 = vsel %vm1491, %v1484, %v1488
        %v1493 = vand.u32 2147483647, %v1300
        %vm1494 = vcmp.eq.f32.partialorder %v1493, 8.507059e+37
        %v1495 = vand.u32 %v1300, 2147483648
        %v1496 = vor.u32 1.1754944e-38, %v1495
        %v1497 = vsel %vm1494, %v1496, %v1492
        %v1498 = vmul.f32 1.0, %v1497
        %v1499 = vrcp.pop %v1301
        %v1500 = vmul.f32 %v1301, %v1499
        %v1501 = vsub.f32 1.0, %v1500
        %v1502 = vmul.f32 %v1499, %v1501
        %v1503 = vadd.f32 %v1499, %v1502
        %vm1504 = vweird.f32 %v1301
        %vm1505 = vweird.f32 %v1499
        %vm1506 = vmor %vm1504, %vm1505
        %v1507 = vsel %vm1506, %v1499, %v1503
        %v1508 = vand.u32 2147483647, %v1301
        %vm1509 = vcmp.eq.f32.partialorder %v1508, 8.507059e+37
        %v1510 = vand.u32 %v1301, 2147483648
        %v1511 = vor.u32 1.1754944e-38, %v1510
        %v1512 = vsel %vm1509, %v1511, %v1507
        %v1513 = vmul.f32 1.0, %v1512
        %v1514 = vrcp.pop %v1302
        %v1515 = vmul.f32 %v1302, %v1514
        %v1516 = vsub.f32 1.0, %v1515
        %v1517 = vmul.f32 %v1514, %v1516
        %v1518 = vadd.f32 %v1514, %v1517
        %vm1519 = vweird.f32 %v1302
        %vm1520 = vweird.f32 %v1514
        %vm1521 = vmor %vm1519, %vm1520
        %v1522 = vsel %vm1521, %v1514, %v1518
        %v1523 = vand.u32 2147483647, %v1302
        %vm1524 = vcmp.eq.f32.partialorder %v1523, 8.507059e+37
        %v1525 = vand.u32 %v1302, 2147483648
        %v1526 = vor.u32 1.1754944e-38, %v1525
        %v1527 = vsel %vm1524, %v1526, %v1522
        %v1528 = vmul.f32 1.0, %v1527
        %v1529 = vrcp.pop %v1303
        %v1530 = vmul.f32 %v1303, %v1529
        %v1531 = vsub.f32 1.0, %v1530
        %v1532 = vmul.f32 %v1529, %v1531
        %v1533 = vadd.f32 %v1529, %v1532
        %vm1534 = vweird.f32 %v1303
        %vm1535 = vweird.f32 %v1529
        %vm1536 = vmor %vm1534, %vm1535
        %v1537 = vsel %vm1536, %v1529, %v1533
        %v1538 = vand.u32 2147483647, %v1303
        %vm1539 = vcmp.eq.f32.partialorder %v1538, 8.507059e+37
        %v1540 = vand.u32 %v1303, 2147483648
        %v1541 = vor.u32 1.1754944e-38, %v1540
        %v1542 = vsel %vm1539, %v1541, %v1537
        %v1543 = vmul.f32 1.0, %v1542
        %1544 = vst.msk [vmem:[%s444] sm:$0xff] %vm585, %v1318
        %1545 = vst.msk [vmem:[%s444 + $0x8] sm:$0xff] %vm585, %v1333
        %1546 = vst.msk [vmem:[%s444 + $0x10] sm:$0xff] %vm585, %v1348
        %1547 = vst.msk [vmem:[%s444 + $0x18] sm:$0xff] %vm585, %v1363
        %1548 = vst.msk [vmem:[%s444 + $0x20] sm:$0xff] %vm585, %v1378
        %1549 = vst.msk [vmem:[%s444 + $0x28] sm:$0xff] %vm585, %v1393
        %1550 = vst.msk [vmem:[%s444 + $0x30] sm:$0xff] %vm585, %v1408
        %1551 = vst.msk [vmem:[%s444 + $0x38] sm:$0xff] %vm585, %v1423
        %1552 = vst.msk [vmem:[%s444 + $0x40] sm:$0xff] %vm585, %v1438
        %1553 = vst.msk [vmem:[%s444 + $0x48] sm:$0xff] %vm585, %v1453
        %1554 = vst.msk [vmem:[%s444 + $0x50] sm:$0xff] %vm585, %v1468
        %1555 = vst.msk [vmem:[%s444 + $0x58] sm:$0xff] %vm585, %v1483
        %1556 = vst.msk [vmem:[%s444 + $0x60] sm:$0xff] %vm585, %v1498
        %1557 = vst.msk [vmem:[%s444 + $0x68] sm:$0xff] %vm585, %v1513
        %1558 = vst.msk [vmem:[%s444 + $0x70] sm:$0xff] %vm585, %v1528
        %1559 = vst.msk [vmem:[%s444 + $0x78] sm:$0xff] %vm585, %v1543
        %s1560 = sand.u32 %s276, 1
        %s1561 = sand.u32 %s276, 1
        %s1562 = smul.addr %s1561, 128
        %s1563 = scalar_lea.vmem [#allocation2], %s1562
        // Predicated region
        $region65: #{full_network.1} parent=63 // pred_check
          %p1564 = pneg %p286
        $region66: #{full_network.1} parent=63 // pred_check_branch
          %1566 = sbr.rel (%p1564) target = $region68
        $region67: #{full_network.1} parent=63 // pred_region
          %s1567 = smul.u32 16, %s22
          %s1568 = ssub.s32 25, %s1567
          %p1569 = scmp.lt.s32.totalorder %s1568, 16
          %s1570 = scalar_select %p1569, %s1568, 16
          %s1571 = smul.u32 8, %s1570
          %p1572 = scmp.ne.s32.totalorder 0, %s1571
          %s1573 = smul.addr %s1567, 8
          %s1574 = scalar_lea.vmem %s11, %s1573
          // Predicated region
          $region69: #{full_network.1} parent=67 // pred_check
            %p1575 = pneg %p1572
          $region70: #{full_network.1} parent=67 // pred_check_branch
            %1577 = sbr.rel (%p1575) target = $region72
          $region71: #{full_network.1} parent=67 // pred_region
            // Predicated region
            $region73: #{full_network.1} parent=71 // pred_check
              _
            $region74: #{full_network.1} parent=71 // pred_check_branch
              %1579 = sbr.rel (0) target = $region76
            $region75: #{full_network.1} parent=71 // pred_region
              // Predicated region
              $region95: #{full_network.1} parent=75 // pred_check
                _
              $region96: #{full_network.1} parent=75 // pred_check_branch
                %1659 = sbr.rel (0) target = $region98
              $region97: #{full_network.1} parent=75 // pred_region
                %s1660 = sshrl.u32 %s1570, 4
                // While loop
                $region99: #{full_network.1} parent=97 // loop_pre_header
                  _
                $region100: #{full_network.1} parent=97 // loop_header
                  %s1662 = sphi 0, %s1664
                  %p1663 = scmp.ge.s32.totalorder %s1662, %s1660
                  %s1667 = sphi 0, %s1704
                  %s1668 = sphi %s1563, %s1707
                  %s1669 = sphi %s1574, %s1708
                $region101: #{full_network.1} parent=97 // loop_header_branch
                  %1666 = sbr.rel (%p1663) target = $region105
                $region102: #{full_network.1} parent=97 // loop_body
                  %v1670 = vld [vmem:[%s1668] sm:$0xff]
                  %1671 = vst [vmem:[%s1669] sm:$0xff] %v1670
                  %v1672 = vld [vmem:[%s1668 + $0x8] sm:$0xff]
                  %1673 = vst [vmem:[%s1669 + $0x8] sm:$0xff] %v1672
                  %v1674 = vld [vmem:[%s1668 + $0x10] sm:$0xff]
                  %1675 = vst [vmem:[%s1669 + $0x10] sm:$0xff] %v1674
                  %v1676 = vld [vmem:[%s1668 + $0x18] sm:$0xff]
                  %1677 = vst [vmem:[%s1669 + $0x18] sm:$0xff] %v1676
                  %v1678 = vld [vmem:[%s1668 + $0x20] sm:$0xff]
                  %1679 = vst [vmem:[%s1669 + $0x20] sm:$0xff] %v1678
                  %v1680 = vld [vmem:[%s1668 + $0x28] sm:$0xff]
                  %1681 = vst [vmem:[%s1669 + $0x28] sm:$0xff] %v1680
                  %v1682 = vld [vmem:[%s1668 + $0x30] sm:$0xff]
                  %1683 = vst [vmem:[%s1669 + $0x30] sm:$0xff] %v1682
                  %v1684 = vld [vmem:[%s1668 + $0x38] sm:$0xff]
                  %1685 = vst [vmem:[%s1669 + $0x38] sm:$0xff] %v1684
                  %v1686 = vld [vmem:[%s1668 + $0x40] sm:$0xff]
                  %1687 = vst [vmem:[%s1669 + $0x40] sm:$0xff] %v1686
                  %v1688 = vld [vmem:[%s1668 + $0x48] sm:$0xff]
                  %1689 = vst [vmem:[%s1669 + $0x48] sm:$0xff] %v1688
                  %v1690 = vld [vmem:[%s1668 + $0x50] sm:$0xff]
                  %1691 = vst [vmem:[%s1669 + $0x50] sm:$0xff] %v1690
                  %v1692 = vld [vmem:[%s1668 + $0x58] sm:$0xff]
                  %1693 = vst [vmem:[%s1669 + $0x58] sm:$0xff] %v1692
                  %v1694 = vld [vmem:[%s1668 + $0x60] sm:$0xff]
                  %1695 = vst [vmem:[%s1669 + $0x60] sm:$0xff] %v1694
                  %v1696 = vld [vmem:[%s1668 + $0x68] sm:$0xff]
                  %1697 = vst [vmem:[%s1669 + $0x68] sm:$0xff] %v1696
                  %v1698 = vld [vmem:[%s1668 + $0x70] sm:$0xff]
                  %1699 = vst [vmem:[%s1669 + $0x70] sm:$0xff] %v1698
                  %v1700 = vld [vmem:[%s1668 + $0x78] sm:$0xff]
                  %1701 = vst [vmem:[%s1669 + $0x78] sm:$0xff] %v1700
                  %s1702 = sadd.s32 1, %s1667
                  %p1703 = scmp.ge.s32.totalorder %s1702, %s1660
                  %s1704 = scalar_select %p1703, 0, %s1702
                  %s1705 = smul.u32 %s1704, 128
                  %s1706 = smul.u32 %s1704, 128
                  %s1707 = scalar_lea.vmem %s1563, %s1705 [#allocation2]
                  %s1708 = scalar_lea.vmem %s1574, %s1706
                $region103: #{full_network.1} parent=97 // loop_footer
                  %s1664 = sadd.s32 %s1662, 1
                $region104: #{full_network.1} parent=97 // loop_footer_branch
                  %1661 = sbr.rel target = $region100
                $region105: #{full_network.1} parent=97 // loop_exit
                  _
                %s1709 = sshrl.u32 %s1570, 4
                %s1710 = sand.u32 %s1570, 15
                %s1711 = smul.u32 %s1709, 16
                %s1712 = smul.u32 8, %s1711
                %s1713 = scalar_lea.vmem %s1563, %s1712 [#allocation2]
                %s1714 = smul.u32 8, %s1711
                %s1715 = scalar_lea.vmem %s1574, %s1714
                // While loop
                $region106: #{full_network.1} parent=97 // loop_pre_header
                  _
                $region107: #{full_network.1} parent=97 // loop_header
                  %s1717 = sphi 0, %s1719
                  %p1718 = scmp.ge.s32.totalorder %s1717, %s1710
                  %s1722 = sphi 0, %s1729
                  %s1723 = sphi %s1713, %s1732
                  %s1724 = sphi %s1715, %s1733
                $region108: #{full_network.1} parent=97 // loop_header_branch
                  %1721 = sbr.rel (%p1718) target = $region112
                $region109: #{full_network.1} parent=97 // loop_body
                  %v1725 = vld [vmem:[%s1723] sm:$0xff]
                  %1726 = vst [vmem:[%s1724] sm:$0xff] %v1725
                  %s1727 = sadd.s32 1, %s1722
                  %p1728 = scmp.ge.s32.totalorder %s1727, %s1710
                  %s1729 = scalar_select %p1728, 0, %s1727
                  %s1730 = smul.u32 %s1729, 8
                  %s1731 = smul.u32 %s1729, 8
                  %s1732 = scalar_lea.vmem %s1713, %s1730 [#allocation2]
                  %s1733 = scalar_lea.vmem %s1715, %s1731
                $region110: #{full_network.1} parent=97 // loop_footer
                  %s1719 = sadd.s32 %s1717, 1
                $region111: #{full_network.1} parent=97 // loop_footer_branch
                  %1716 = sbr.rel target = $region107
                $region112: #{full_network.1} parent=97 // loop_exit
                  _
              $region98: #{full_network.1} parent=75 // pred_fallthru
                _
              // Predicated region
              $region113: #{full_network.1} parent=75 // pred_check
                _
              $region114: #{full_network.1} parent=75 // pred_check_branch
                %1735 = sbr.rel target = $region116
              $region115: #{full_network.1} parent=75 // pred_region
                _
              $region116: #{full_network.1} parent=75 // pred_fallthru
                _
            $region76: #{full_network.1} parent=71 // pred_fallthru
              _
            // Predicated region
            $region77: #{full_network.1} parent=71 // pred_check
              _
            $region78: #{full_network.1} parent=71 // pred_check_branch
              %1581 = sbr.rel target = $region80
            $region79: #{full_network.1} parent=71 // pred_region
              %s1583 = ssub.s32 256, 1
              %s1584 = sshrl.u32 %s1570, 4
              // While loop
              $region81: #{full_network.1} parent=79 // loop_pre_header
                _
              $region82: #{full_network.1} parent=79 // loop_header
                %s1586 = sphi 0, %s1588
                %p1587 = scmp.ge.s32.totalorder %s1586, %s1584
                %s1591 = sphi 0, %s1628
                %s1592 = sphi %s1563, %s1631
                %s1593 = sphi %s1574, %s1632
              $region83: #{full_network.1} parent=79 // loop_header_branch
                %1590 = sbr.rel (%p1587) target = $region87
              $region84: #{full_network.1} parent=79 // loop_body
                %v1594 = vld [vmem:[%s1592] sm:%s1583]
                %1595 = vst [vmem:[%s1593] sm:%s1583] %v1594
                %v1596 = vld [vmem:[%s1592 + $0x8] sm:%s1583]
                %1597 = vst [vmem:[%s1593 + $0x8] sm:%s1583] %v1596
                %v1598 = vld [vmem:[%s1592 + $0x10] sm:%s1583]
                %1599 = vst [vmem:[%s1593 + $0x10] sm:%s1583] %v1598
                %v1600 = vld [vmem:[%s1592 + $0x18] sm:%s1583]
                %1601 = vst [vmem:[%s1593 + $0x18] sm:%s1583] %v1600
                %v1602 = vld [vmem:[%s1592 + $0x20] sm:%s1583]
                %1603 = vst [vmem:[%s1593 + $0x20] sm:%s1583] %v1602
                %v1604 = vld [vmem:[%s1592 + $0x28] sm:%s1583]
                %1605 = vst [vmem:[%s1593 + $0x28] sm:%s1583] %v1604
                %v1606 = vld [vmem:[%s1592 + $0x30] sm:%s1583]
                %1607 = vst [vmem:[%s1593 + $0x30] sm:%s1583] %v1606
                %v1608 = vld [vmem:[%s1592 + $0x38] sm:%s1583]
                %1609 = vst [vmem:[%s1593 + $0x38] sm:%s1583] %v1608
                %v1610 = vld [vmem:[%s1592 + $0x40] sm:%s1583]
                %1611 = vst [vmem:[%s1593 + $0x40] sm:%s1583] %v1610
                %v1612 = vld [vmem:[%s1592 + $0x48] sm:%s1583]
                %1613 = vst [vmem:[%s1593 + $0x48] sm:%s1583] %v1612
                %v1614 = vld [vmem:[%s1592 + $0x50] sm:%s1583]
                %1615 = vst [vmem:[%s1593 + $0x50] sm:%s1583] %v1614
                %v1616 = vld [vmem:[%s1592 + $0x58] sm:%s1583]
                %1617 = vst [vmem:[%s1593 + $0x58] sm:%s1583] %v1616
                %v1618 = vld [vmem:[%s1592 + $0x60] sm:%s1583]
                %1619 = vst [vmem:[%s1593 + $0x60] sm:%s1583] %v1618
                %v1620 = vld [vmem:[%s1592 + $0x68] sm:%s1583]
                %1621 = vst [vmem:[%s1593 + $0x68] sm:%s1583] %v1620
                %v1622 = vld [vmem:[%s1592 + $0x70] sm:%s1583]
                %1623 = vst [vmem:[%s1593 + $0x70] sm:%s1583] %v1622
                %v1624 = vld [vmem:[%s1592 + $0x78] sm:%s1583]
                %1625 = vst [vmem:[%s1593 + $0x78] sm:%s1583] %v1624
                %s1626 = sadd.s32 1, %s1591
                %p1627 = scmp.ge.s32.totalorder %s1626, %s1584
                %s1628 = scalar_select %p1627, 0, %s1626
                %s1629 = smul.u32 %s1628, 128
                %s1630 = smul.u32 %s1628, 128
                %s1631 = scalar_lea.vmem %s1563, %s1629 [#allocation2]
                %s1632 = scalar_lea.vmem %s1574, %s1630
              $region85: #{full_network.1} parent=79 // loop_footer
                %s1588 = sadd.s32 %s1586, 1
              $region86: #{full_network.1} parent=79 // loop_footer_branch
                %1585 = sbr.rel target = $region82
              $region87: #{full_network.1} parent=79 // loop_exit
                _
              %s1633 = sshrl.u32 %s1570, 4
              %s1634 = sand.u32 %s1570, 15
              %s1635 = smul.u32 %s1633, 16
              %s1636 = smul.u32 8, %s1635
              %s1637 = scalar_lea.vmem %s1563, %s1636 [#allocation2]
              %s1638 = smul.u32 8, %s1635
              %s1639 = scalar_lea.vmem %s1574, %s1638
              // While loop
              $region88: #{full_network.1} parent=79 // loop_pre_header
                _
              $region89: #{full_network.1} parent=79 // loop_header
                %s1641 = sphi 0, %s1643
                %p1642 = scmp.ge.s32.totalorder %s1641, %s1634
                %s1646 = sphi 0, %s1653
                %s1647 = sphi %s1637, %s1656
                %s1648 = sphi %s1639, %s1657
              $region90: #{full_network.1} parent=79 // loop_header_branch
                %1645 = sbr.rel (%p1642) target = $region94
              $region91: #{full_network.1} parent=79 // loop_body
                %v1649 = vld [vmem:[%s1647] sm:%s1583]
                %1650 = vst [vmem:[%s1648] sm:%s1583] %v1649
                %s1651 = sadd.s32 1, %s1646
                %p1652 = scmp.ge.s32.totalorder %s1651, %s1634
                %s1653 = scalar_select %p1652, 0, %s1651
                %s1654 = smul.u32 %s1653, 8
                %s1655 = smul.u32 %s1653, 8
                %s1656 = scalar_lea.vmem %s1637, %s1654 [#allocation2]
                %s1657 = scalar_lea.vmem %s1639, %s1655
              $region92: #{full_network.1} parent=79 // loop_footer
                %s1643 = sadd.s32 %s1641, 1
              $region93: #{full_network.1} parent=79 // loop_footer_branch
                %1640 = sbr.rel target = $region89
              $region94: #{full_network.1} parent=79 // loop_exit
                _
            $region80: #{full_network.1} parent=71 // pred_fallthru
              _
          $region72: #{full_network.1} parent=67 // pred_fallthru
            _
          %1736 = vnop
        $region68: #{full_network.1} parent=63 // pred_fallthru
          _
      $region64: #{full_network.1} parent=5 // pred_fallthru
        _
      %p1737 = scmp.le.s32.totalorder 2, %s17
      // Predicated region
      $region117: #{full_network.1} parent=5 // pred_check
        %p1738 = pneg %p1737
      $region118: #{full_network.1} parent=5 // pred_check_branch
        %1740 = sbr.rel (%p1738) target = $region120
      $region119: #{full_network.1} parent=5 // pred_region
        %s1741 = ssub.s32 %s17, 2
        // Predicated region
        $region121: #{full_network.1} parent=119 // pred_check
          %p1742 = pneg %p292
        $region122: #{full_network.1} parent=119 // pred_check_branch
          %1744 = sbr.rel (%p1742) target = $region124
        $region123: #{full_network.1} parent=119 // pred_region
          %s1745 = sand.u32 %s277, 1
          %s1746 = sand.u32 %s277, 1
          %s1747 = smul.addr %s1746, 128
          %s1748 = scalar_lea.vmem [#allocation2], %s1747
        $region124: #{full_network.1} parent=119 // pred_fallthru
          _
      $region120: #{full_network.1} parent=5 // pred_fallthru
        _
    $region6: #{full_network.1} parent=1 // loop_footer
      %s21 = sadd.s32 1, %s17
    $region7: #{full_network.1} parent=1 // loop_footer_branch
      %16 = sbr.rel target = $region3
    $region8: #{full_network.1} parent=1 // loop_exit
      _

</llo_original>
